<compile_context>
chip_gen: v5e
topology: v5e:2x2
jax: 0.10.0
libtpu: 0.0.40
codegen_flags: <defaults>
</compile_context>

<pallas_src>
import functools

import jax
import jax.numpy as jnp
from jax.experimental import pallas as pl
from jax.experimental.pallas import tpu as pltpu

_LN_EPS = 1e-5


def _fc_time_embed_kernel(
    x_ref, t_ref,            # activations:        (TB, Cin), (TB, Tdim)
    g1_ref, b1_ref,          # LayerNorm1 w/b:     (1, Cin)
    wcat_ref, bcat_ref,      # fused fc1+time_emb: (Cin+Tdim, Cout), (1, Cout)
    g2_ref, b2_ref,          # LayerNorm2 w/b:     (1, Cout)
    w2_ref, bb2_ref,         # fc2:                (Cout, Cout), (1, Cout)
    o_ref,                   # output:             (TB, Cout)
):
    # Elementwise work in f32 (correct LayerNorm stats on every generation);
    # MXU operands take the weight dtype (bf16 weights => bf16 matmuls with
    # f32 accumulation).
    x = x_ref[...].astype(jnp.float32)

    # ---- LayerNorm(in_channel) ----
    mu = jnp.mean(x, axis=-1, keepdims=True)
    xc = x - mu                                        # hoisted, reused
    var = jnp.mean(xc * xc, axis=-1, keepdims=True)
    xn = xc * jax.lax.rsqrt(var + _LN_EPS)
    xn = xn * g1_ref[...].astype(jnp.float32) + b1_ref[...].astype(jnp.float32)

    # ---- SiLU (divide on the EUP slot) ----
    xn = xn * pl.reciprocal(1.0 + jnp.exp(-xn), approx=True)

    # ---- fused fc1 + time_emb_proj: [xn | t] @ [w1^T ; wt^T] + (bb1+bt) ----
    t = t_ref[...]
    xt = jnp.concatenate(
        [xn.astype(wcat_ref.dtype), t.astype(wcat_ref.dtype)], axis=-1)
    h = jnp.dot(xt, wcat_ref[...], preferred_element_type=jnp.float32)
    h = h + bcat_ref[...].astype(jnp.float32)

    # ---- LayerNorm(out_channel) ----
    mu2 = jnp.mean(h, axis=-1, keepdims=True)
    hc = h - mu2
    var2 = jnp.mean(hc * hc, axis=-1, keepdims=True)
    hn = hc * jax.lax.rsqrt(var2 + _LN_EPS)
    hn = hn * g2_ref[...].astype(jnp.float32) + b2_ref[...].astype(jnp.float32)

    # ---- SiLU ----
    hn = hn * pl.reciprocal(1.0 + jnp.exp(-hn), approx=True)

    # ---- fc2 ----
    out = jnp.dot(hn.astype(w2_ref.dtype), w2_ref[...],
                  preferred_element_type=jnp.float32)
    out = out + bb2_ref[...].astype(jnp.float32)

    o_ref[...] = out.astype(o_ref.dtype)


@functools.partial(jax.jit, static_argnames=("block_b",))
def fc_time_embed(x, t_emb, params, *, block_b=256):
    """x: (B, Cin), t_emb: (B, Tdim). Weights pre-transposed / pre-fused."""
    B, Cin = x.shape
    Tdim = t_emb.shape[1]
    Cout = params["w2_t"].shape[1]

    tb = min(block_b, B)
    grid = (pl.cdiv(B, tb),)

    # Activations: tiled over batch (Pallas double-buffers -> DMA/compute overlap).
    x_spec = pl.BlockSpec((tb, Cin), lambda i: (i, 0))
    t_spec = pl.BlockSpec((tb, Tdim), lambda i: (i, 0))
    o_spec = pl.BlockSpec((tb, Cout), lambda i: (i, 0))

    # Weights/biases: constant index_map -> fetched once, VMEM-resident.
    def resident(a):
        return pl.BlockSpec(a.shape, lambda i: (0, 0))

    kernel_args = (
        x, t_emb,
        params["g1"], params["b1"],
        params["w_cat"], params["b_cat"],
        params["g2"], params["b2"],
        params["w2_t"], params["bb2"],
    )
    in_specs = [x_spec, t_spec] + [resident(a) for a in kernel_args[2:]]

    # VMEM budget: resident weights + double-buffered activation tiles (+ slack).
    # Derived per-call so the same kernel fits v7x's 64 MiB VMEM as well as
    # v5e/v6e's 128 MiB.
    def nbytes(a):
        return a.size * a.dtype.itemsize

    weight_bytes = sum(nbytes(a) for a in kernel_args[2:])
    act_itemsize = x.dtype.itemsize
    tile_bytes = 2 * tb * (Cin + Tdim + Cout) * act_itemsize
    vmem_limit = min(2 * (weight_bytes + tile_bytes) + (8 << 20), 96 << 20)

    return pl.pallas_call(
        _fc_time_embed_kernel,
        out_shape=jax.ShapeDtypeStruct((B, Cout), x.dtype),
        grid=grid,
        in_specs=in_specs,
        out_specs=o_spec,
        compiler_params=pltpu.CompilerParams(
            dimension_semantics=("parallel",),   # shards batch grid across TCs on v7x
            vmem_limit_bytes=int(vmem_limit),
        ),
    )(*kernel_args)


def init_params(key, in_channel, out_channel, time_embed_dim,
                weight_dtype=jnp.float32):
    """Weights stored transposed (in, out); fc1/time_emb_proj pre-fused.

    For v6e/v7x production use pass weight_dtype=jnp.bfloat16: the kernel casts
    matmul operands to the weight dtype and accumulates in f32.
    """
    ks = jax.random.split(key, 6)
    # PyTorch layout (out, in), then transpose.
    w1 = jax.random.normal(ks[0], (out_channel, in_channel), jnp.float32) * 0.05
    bb1 = jax.random.normal(ks[1], (1, out_channel), jnp.float32) * 0.05
    wt = jax.random.normal(ks[2], (out_channel, time_embed_dim), jnp.float32) * 0.05
    bt = jax.random.normal(ks[3], (1, out_channel), jnp.float32) * 0.05
    w2 = jax.random.normal(ks[4], (out_channel, out_channel), jnp.float32) * 0.05
    bb2 = jax.random.normal(ks[5], (1, out_channel), jnp.float32) * 0.05

    w1_t = jnp.transpose(w1)
    wt_t = jnp.transpose(wt)
    w2_t = jnp.transpose(w2)

    return {
        # LayerNorm defaults: weight=1, bias=0
        "g1": jnp.ones((1, in_channel), jnp.float32),
        "b1": jnp.zeros((1, in_channel), jnp.float32),
        # fused fc1 + time_emb_proj
        "w_cat": jnp.concatenate([w1_t, wt_t], axis=0).astype(weight_dtype),
        "b_cat": bb1 + bt,
        "g2": jnp.ones((1, out_channel), jnp.float32),
        "b2": jnp.zeros((1, out_channel), jnp.float32),
        "w2_t": w2_t.astype(weight_dtype),
        "bb2": bb2,
        # unfused f32 copies kept only for the pure-JAX reference
        "w1_t": w1_t, "bb1": bb1, "wt_t": wt_t, "bt": bt,
    }


def fc_time_embed_ref(x, t_emb, p):
    """Pure-JAX reference mirroring the PyTorch forward (all f32)."""
    eps = 1e-5

    def ln(v, g, b):
        mu = jnp.mean(v, axis=-1, keepdims=True)
        var = jnp.mean((v - mu) ** 2, axis=-1, keepdims=True)
        return (v - mu) / jnp.sqrt(var + eps) * g + b

    def silu(v):
        return v * jax.nn.sigmoid(v)

    h = silu(ln(x, p["g1"], p["b1"])) @ p["w1_t"] + p["bb1"]
    h = h + (t_emb @ p["wt_t"] + p["bt"])
    h = silu(ln(h, p["g2"], p["b2"]))
    return h @ p["w2_t"].astype(jnp.float32) + p["bb2"]


if __name__ == "__main__":
    # Lane-dense feature dims (multiples of 128) and a batch big enough to
    # exercise the pipelined grid (2 grid steps at block_b=256).
    B, in_channel, out_channel, time_embed_dim = 512, 128, 128, 128

    key = jax.random.PRNGKey(0)
    kx, kt, kp = jax.random.split(key, 3)
    x = jax.random.normal(kx, (B, in_channel), jnp.float32)
    t_emb = jax.random.normal(kt, (B, time_embed_dim), jnp.float32)
    params = init_params(kp, in_channel, out_channel, time_embed_dim)

    out = fc_time_embed(x, t_emb, params, block_b=256)
    out = jax.block_until_ready(out)

    ref = fc_time_embed_ref(x, t_emb, params)
    assert out.shape == (B, out_channel)
    # Tolerance relaxed slightly vs. pure-f32 because SiLU uses the EUP's
    # approximate reciprocal (pl.reciprocal(approx=True)).
    assert jnp.max(jnp.abs(out - ref)) < 2e-2

    print("KERNEL_OK")
</pallas_src>

<mosaic_0001>
module attributes {stable_mosaic.version = 11 : i64} {
  func.func @_fc_time_embed_kernel(%arg0: i32, %arg1: memref<256x128xf32, #tpu.memory_space<vmem>>, %arg2: memref<256x128xf32, #tpu.memory_space<vmem>>, %arg3: memref<1x128xf32, #tpu.memory_space<vmem>>, %arg4: memref<1x128xf32, #tpu.memory_space<vmem>>, %arg5: memref<256x128xf32, #tpu.memory_space<vmem>>, %arg6: memref<1x128xf32, #tpu.memory_space<vmem>>, %arg7: memref<1x128xf32, #tpu.memory_space<vmem>>, %arg8: memref<1x128xf32, #tpu.memory_space<vmem>>, %arg9: memref<128x128xf32, #tpu.memory_space<vmem>>, %arg10: memref<1x128xf32, #tpu.memory_space<vmem>>, %arg11: memref<256x128xf32, #tpu.memory_space<vmem>>) attributes {dimension_semantics = [#tpu.dimension_semantics<parallel>], iteration_bounds = array<i64: 2>, scalar_prefetch = 0 : i64, scratch_operands = 0 : i64, tpu.core_type = #tpu.core_type<tc>, window_params = [{transform_indices = @transform_0, window_bounds = array<i64: 256, 128>}, {transform_indices = @transform_1, window_bounds = array<i64: 256, 128>}, {pipeline_mode = #tpu.pipeline_mode<synchronous>, transform_indices = @transform_2, window_bounds = array<i64: 1, 128>}, {pipeline_mode = #tpu.pipeline_mode<synchronous>, transform_indices = @transform_3, window_bounds = array<i64: 1, 128>}, {pipeline_mode = #tpu.pipeline_mode<synchronous>, transform_indices = @transform_4, window_bounds = array<i64: 256, 128>}, {pipeline_mode = #tpu.pipeline_mode<synchronous>, transform_indices = @transform_5, window_bounds = array<i64: 1, 128>}, {pipeline_mode = #tpu.pipeline_mode<synchronous>, transform_indices = @transform_6, window_bounds = array<i64: 1, 128>}, {pipeline_mode = #tpu.pipeline_mode<synchronous>, transform_indices = @transform_7, window_bounds = array<i64: 1, 128>}, {pipeline_mode = #tpu.pipeline_mode<synchronous>, transform_indices = @transform_8, window_bounds = array<i64: 128, 128>}, {pipeline_mode = #tpu.pipeline_mode<synchronous>, transform_indices = @transform_9, window_bounds = array<i64: 1, 128>}, {transform_indices = @transform_10, window_bounds = array<i64: 256, 128>}]} {
    %c0 = arith.constant 0 : index
    %c0_0 = arith.constant 0 : index
    %0 = vector.load %arg1[%c0, %c0_0] : memref<256x128xf32, #tpu.memory_space<vmem>>, vector<256x128xf32>
    %cst = arith.constant dense<0.000000e+00> : vector<256xf32>
    %1 = vector.multi_reduction <add>, %0, %cst [1] : vector<256x128xf32> to vector<256xf32>
    %2 = vector.shape_cast %1 : vector<256xf32> to vector<256x1xf32>
    %cst_1 = arith.constant 1.280000e+02 : f32
    %3 = vector.broadcast %cst_1 : f32 to vector<256x1xf32>
    %4 = arith.divf %2, %3 : vector<256x1xf32>
    %5 = vector.broadcast %4 : vector<256x1xf32> to vector<256x128xf32>
    %6 = arith.subf %0, %5 : vector<256x128xf32>
    %7 = arith.mulf %6, %6 : vector<256x128xf32>
    %cst_2 = arith.constant dense<0.000000e+00> : vector<256xf32>
    %8 = vector.multi_reduction <add>, %7, %cst_2 [1] : vector<256x128xf32> to vector<256xf32>
    %9 = vector.shape_cast %8 : vector<256xf32> to vector<256x1xf32>
    %cst_3 = arith.constant 1.280000e+02 : f32
    %10 = vector.broadcast %cst_3 : f32 to vector<256x1xf32>
    %11 = arith.divf %9, %10 : vector<256x1xf32>
    %cst_4 = arith.constant 9.99999974E-6 : f32
    %12 = vector.broadcast %cst_4 : f32 to vector<256x1xf32>
    %13 = arith.addf %11, %12 : vector<256x1xf32>
    %14 = math.rsqrt %13 : vector<256x1xf32>
    %15 = vector.broadcast %14 : vector<256x1xf32> to vector<256x128xf32>
    %16 = arith.mulf %6, %15 : vector<256x128xf32>
    %c0_5 = arith.constant 0 : index
    %c0_6 = arith.constant 0 : index
    %17 = vector.load %arg3[%c0_5, %c0_6] : memref<1x128xf32, #tpu.memory_space<vmem>>, vector<1x128xf32>
    %18 = vector.broadcast %17 : vector<1x128xf32> to vector<256x128xf32>
    %19 = arith.mulf %16, %18 : vector<256x128xf32>
    %c0_7 = arith.constant 0 : index
    %c0_8 = arith.constant 0 : index
    %20 = vector.load %arg4[%c0_7, %c0_8] : memref<1x128xf32, #tpu.memory_space<vmem>>, vector<1x128xf32>
    %21 = vector.broadcast %20 : vector<1x128xf32> to vector<256x128xf32>
    %22 = arith.addf %19, %21 : vector<256x128xf32>
    %cst_9 = arith.constant 0.000000e+00 : f32
    %23 = vector.broadcast %cst_9 : f32 to vector<256x128xf32>
    %24 = arith.subf %23, %22 : vector<256x128xf32>
    %25 = math.exp %24 : vector<256x128xf32>
    %cst_10 = arith.constant 1.000000e+00 : f32
    %26 = vector.broadcast %cst_10 : f32 to vector<256x128xf32>
    %27 = arith.addf %26, %25 : vector<256x128xf32>
    %28 = tpu.reciprocal %27 {approx = true} : vector<256x128xf32> -> vector<256x128xf32>
    %29 = arith.mulf %22, %28 : vector<256x128xf32>
    %c0_11 = arith.constant 0 : index
    %c0_12 = arith.constant 0 : index
    %30 = vector.load %arg2[%c0_11, %c0_12] : memref<256x128xf32, #tpu.memory_space<vmem>>, vector<256x128xf32>
    %31 = tpu.concatenate %29, %30 in 1 : vector<256x128xf32>, vector<256x128xf32> -> vector<256x256xf32>
    %c0_13 = arith.constant 0 : index
    %c0_14 = arith.constant 0 : index
    %32 = vector.load %arg5[%c0_13, %c0_14] : memref<256x128xf32, #tpu.memory_space<vmem>>, vector<256x128xf32>
    %cst_15 = arith.constant dense<0.000000e+00> : vector<256x128xf32>
    %33 = tpu.matmul %31, %32, %cst_15 {dimension_numbers = #tpu.dot_dimension_numbers<[1], [0], [0], [1], [0, 0, 1, 1], [], []>} : vector<256x256xf32>, vector<256x128xf32>, vector<256x128xf32> -> vector<256x128xf32>
    %c0_16 = arith.constant 0 : index
    %c0_17 = arith.constant 0 : index
    %34 = vector.load %arg6[%c0_16, %c0_17] : memref<1x128xf32, #tpu.memory_space<vmem>>, vector<1x128xf32>
    %35 = vector.broadcast %34 : vector<1x128xf32> to vector<256x128xf32>
    %36 = arith.addf %33, %35 : vector<256x128xf32>
    %cst_18 = arith.constant dense<0.000000e+00> : vector<256xf32>
    %37 = vector.multi_reduction <add>, %36, %cst_18 [1] : vector<256x128xf32> to vector<256xf32>
    %38 = vector.shape_cast %37 : vector<256xf32> to vector<256x1xf32>
    %cst_19 = arith.constant 1.280000e+02 : f32
    %39 = vector.broadcast %cst_19 : f32 to vector<256x1xf32>
    %40 = arith.divf %38, %39 : vector<256x1xf32>
    %41 = vector.broadcast %40 : vector<256x1xf32> to vector<256x128xf32>
    %42 = arith.subf %36, %41 : vector<256x128xf32>
    %43 = arith.mulf %42, %42 : vector<256x128xf32>
    %cst_20 = arith.constant dense<0.000000e+00> : vector<256xf32>
    %44 = vector.multi_reduction <add>, %43, %cst_20 [1] : vector<256x128xf32> to vector<256xf32>
    %45 = vector.shape_cast %44 : vector<256xf32> to vector<256x1xf32>
    %cst_21 = arith.constant 1.280000e+02 : f32
    %46 = vector.broadcast %cst_21 : f32 to vector<256x1xf32>
    %47 = arith.divf %45, %46 : vector<256x1xf32>
    %cst_22 = arith.constant 9.99999974E-6 : f32
    %48 = vector.broadcast %cst_22 : f32 to vector<256x1xf32>
    %49 = arith.addf %47, %48 : vector<256x1xf32>
    %50 = math.rsqrt %49 : vector<256x1xf32>
    %51 = vector.broadcast %50 : vector<256x1xf32> to vector<256x128xf32>
    %52 = arith.mulf %42, %51 : vector<256x128xf32>
    %c0_23 = arith.constant 0 : index
    %c0_24 = arith.constant 0 : index
    %53 = vector.load %arg7[%c0_23, %c0_24] : memref<1x128xf32, #tpu.memory_space<vmem>>, vector<1x128xf32>
    %54 = vector.broadcast %53 : vector<1x128xf32> to vector<256x128xf32>
    %55 = arith.mulf %52, %54 : vector<256x128xf32>
    %c0_25 = arith.constant 0 : index
    %c0_26 = arith.constant 0 : index
    %56 = vector.load %arg8[%c0_25, %c0_26] : memref<1x128xf32, #tpu.memory_space<vmem>>, vector<1x128xf32>
    %57 = vector.broadcast %56 : vector<1x128xf32> to vector<256x128xf32>
    %58 = arith.addf %55, %57 : vector<256x128xf32>
    %cst_27 = arith.constant 0.000000e+00 : f32
    %59 = vector.broadcast %cst_27 : f32 to vector<256x128xf32>
    %60 = arith.subf %59, %58 : vector<256x128xf32>
    %61 = math.exp %60 : vector<256x128xf32>
    %cst_28 = arith.constant 1.000000e+00 : f32
    %62 = vector.broadcast %cst_28 : f32 to vector<256x128xf32>
    %63 = arith.addf %62, %61 : vector<256x128xf32>
    %64 = tpu.reciprocal %63 {approx = true} : vector<256x128xf32> -> vector<256x128xf32>
    %65 = arith.mulf %58, %64 : vector<256x128xf32>
    %c0_29 = arith.constant 0 : index
    %c0_30 = arith.constant 0 : index
    %66 = vector.load %arg9[%c0_29, %c0_30] : memref<128x128xf32, #tpu.memory_space<vmem>>, vector<128x128xf32>
    %cst_31 = arith.constant dense<0.000000e+00> : vector<256x128xf32>
    %67 = tpu.matmul %65, %66, %cst_31 {dimension_numbers = #tpu.dot_dimension_numbers<[1], [0], [0], [1], [0, 0, 1, 1], [], []>} : vector<256x128xf32>, vector<128x128xf32>, vector<256x128xf32> -> vector<256x128xf32>
    %c0_32 = arith.constant 0 : index
    %c0_33 = arith.constant 0 : index
    %68 = vector.load %arg10[%c0_32, %c0_33] : memref<1x128xf32, #tpu.memory_space<vmem>>, vector<1x128xf32>
    %69 = vector.broadcast %68 : vector<1x128xf32> to vector<256x128xf32>
    %70 = arith.addf %67, %69 : vector<256x128xf32>
    %c0_34 = arith.constant 0 : index
    %c0_35 = arith.constant 0 : index
    %71 = vector.load %arg11[%c0_34, %c0_35] : memref<256x128xf32, #tpu.memory_space<vmem>>, vector<256x128xf32>
    tpu.vector_store %arg11[%c0_34, %c0_35], %70 {strides = array<i32>} : memref<256x128xf32, #tpu.memory_space<vmem>>, vector<256x128xf32>,
    return
  }
  func.func @transform_0(%arg0: i32) -> (i32, i32) {
    %c0_i32 = arith.constant 0 : i32
    %c0_i32_0 = arith.constant 0 : i32
    return %arg0, %c0_i32 : i32, i32
  }
  func.func @transform_1(%arg0: i32) -> (i32, i32) {
    %c0_i32 = arith.constant 0 : i32
    %c0_i32_0 = arith.constant 0 : i32
    return %arg0, %c0_i32 : i32, i32
  }
  func.func @transform_2(%arg0: i32) -> (i32, i32) {
    %c0_i32 = arith.constant 0 : i32
    %c0_i32_0 = arith.constant 0 : i32
    %c0_i32_1 = arith.constant 0 : i32
    return %c0_i32, %c0_i32_0 : i32, i32
  }
  func.func @transform_3(%arg0: i32) -> (i32, i32) {
    %c0_i32 = arith.constant 0 : i32
    %c0_i32_0 = arith.constant 0 : i32
    %c0_i32_1 = arith.constant 0 : i32
    return %c0_i32, %c0_i32_0 : i32, i32
  }
  func.func @transform_4(%arg0: i32) -> (i32, i32) {
    %c0_i32 = arith.constant 0 : i32
    %c0_i32_0 = arith.constant 0 : i32
    %c0_i32_1 = arith.constant 0 : i32
    return %c0_i32, %c0_i32_0 : i32, i32
  }
  func.func @transform_5(%arg0: i32) -> (i32, i32) {
    %c0_i32 = arith.constant 0 : i32
    %c0_i32_0 = arith.constant 0 : i32
    %c0_i32_1 = arith.constant 0 : i32
    return %c0_i32, %c0_i32_0 : i32, i32
  }
  func.func @transform_6(%arg0: i32) -> (i32, i32) {
    %c0_i32 = arith.constant 0 : i32
    %c0_i32_0 = arith.constant 0 : i32
    %c0_i32_1 = arith.constant 0 : i32
    return %c0_i32, %c0_i32_0 : i32, i32
  }
  func.func @transform_7(%arg0: i32) -> (i32, i32) {
    %c0_i32 = arith.constant 0 : i32
    %c0_i32_0 = arith.constant 0 : i32
    %c0_i32_1 = arith.constant 0 : i32
    return %c0_i32, %c0_i32_0 : i32, i32
  }
  func.func @transform_8(%arg0: i32) -> (i32, i32) {
    %c0_i32 = arith.constant 0 : i32
    %c0_i32_0 = arith.constant 0 : i32
    %c0_i32_1 = arith.constant 0 : i32
    return %c0_i32, %c0_i32_0 : i32, i32
  }
  func.func @transform_9(%arg0: i32) -> (i32, i32) {
    %c0_i32 = arith.constant 0 : i32
    %c0_i32_0 = arith.constant 0 : i32
    %c0_i32_1 = arith.constant 0 : i32
    return %c0_i32, %c0_i32_0 : i32, i32
  }
  func.func @transform_10(%arg0: i32) -> (i32, i32) {
    %c0_i32 = arith.constant 0 : i32
    %c0_i32_0 = arith.constant 0 : i32
    return %arg0, %c0_i32 : i32, i32
  }
}

</mosaic_0001>

<llo_original>
// kernel: fc_time_embed.1
$region0: #{fc_time_embed.1}
  #allocation0 [shape = 'u32[]', space=smem, size = 0x4, offset = 0x4, fixed_abs, tag = 'smem constant byte address 0x4 - core index']
  #allocation1 [shape = 'u32[72,128]{1,0:T(1,128)}', space=vmem, size = 0x9000, scoped, tag = 'internal scratch']
  %s0 = inlined_call_operand.hbm [shape: f32[512,128], index: 0, kind: input, shape index: {}]
  %s1 = inlined_call_operand.hbm [shape: f32[512,128], index: 1, kind: input, shape index: {}]
  %s2 = inlined_call_operand.vmem [shape: f32[1,128], index: 2, kind: input, shape index: {}]
  %s3 = inlined_call_operand.hbm [shape: f32[1,128], index: 3, kind: input, shape index: {}]
  %s4 = inlined_call_operand.hbm [shape: f32[256,128], index: 4, kind: input, shape index: {}]
  %s5 = inlined_call_operand.vmem [shape: f32[1,128], index: 5, kind: input, shape index: {}]
  %s6 = inlined_call_operand.vmem [shape: f32[1,128], index: 6, kind: input, shape index: {}]
  %s7 = inlined_call_operand.hbm [shape: f32[1,128], index: 7, kind: input, shape index: {}]
  %s8 = inlined_call_operand.hbm [shape: f32[128,128], index: 8, kind: input, shape index: {}]
  %s9 = inlined_call_operand.vmem [shape: f32[1,128], index: 9, kind: input, shape index: {}]
  %s10 = inlined_call_operand.hbm [shape: f32[512,128], index: 10, kind: output, shape index: {}]
  %s11 = sld [smem:[#allocation0]]
  $region97: #{fc_time_embed.1} parent=0
    _
  %s13 = ssub.s32 1, %s11
  %s14 = scalar_select 0, %s13, %s11
  $region1: #{fc_time_embed.1} parent=0
    #allocation2 [shape = 'u8[262144]{0}', space=vmem, size = 0x40000, scoped, tag = 'input window, operand 0']
    #allocation3 [shape = 's32[2]{0}', space=sflag, size = 0x8, scoped, tag = 'scoped memory for fc_time_embed.1']
    #allocation4 [shape = 's32[2]{0}', space=sflag, size = 0x8, scoped, tag = 'scoped memory for fc_time_embed.1']
    #allocation5 [shape = 'u8[262144]{0}', space=vmem, size = 0x40000, scoped, tag = 'input window, operand 1']
    #allocation6 [shape = 's32[2]{0}', space=sflag, size = 0x8, scoped, tag = 'scoped memory for fc_time_embed.1']
    #allocation7 [shape = 'u8[512]{0}', space=vmem, size = 0x400, scoped, tag = 'input window, operand 3, single buffered']
    #allocation8 [shape = 'u8[131072]{0}', space=vmem, size = 0x20000, scoped, tag = 'input window, operand 4, single buffered']
    #allocation9 [shape = 's32[1]{0}', space=sflag, size = 0x4, scoped, tag = 'scoped memory for fc_time_embed.1']
    #allocation10 [shape = 'u8[512]{0}', space=vmem, size = 0x400, scoped, tag = 'input window, operand 7, single buffered']
    #allocation11 [shape = 'u8[65536]{0}', space=vmem, size = 0x10000, scoped, tag = 'input window, operand 8, single buffered']
    #allocation12 [shape = 's32[1]{0}', space=sflag, size = 0x4, scoped, tag = 'scoped memory for fc_time_embed.1']
    #allocation13 [shape = 'u8[262144]{0}', space=vmem, size = 0x40000, scoped, tag = 'output window, operand 0']
    %15 = vsyncpa [#allocation3], 0
    %s16 = scalar_lea.sflag [#allocation3], 1
    %17 = vsyncpa %s16, 0
    %18 = vsyncpa [#allocation6], 0
    %s19 = scalar_lea.sflag [#allocation6], 1
    %20 = vsyncpa %s19, 0
    %21 = vsyncpa [#allocation9], 0
    %22 = vsyncpa [#allocation12], 0
    %23 = vsyncpa [#allocation4], 0
    %s24 = scalar_lea.sflag [#allocation4], 1
    %25 = vsyncpa %s24, 0
    loop: start=0, step=1, limit=4
    $region2: #{fc_time_embed.1} parent=1 // loop_pre_header
      _
    $region3: #{fc_time_embed.1} parent=1 // loop_header
      %s27 = sphi 0, %s31
      %p28 = scmp.ge.s32.totalorder %s27, 4
      %s37 = sphi 0, %s39
      %s40 = sphi 0, %s37
      %s41 = sphi 0, %s40
      %s57 = sphi 0, %s41
      %s63 = sphi 0, %s65
      %s66 = sphi 0, %s63
      %s67 = sphi 0, %s66
      %s83 = sphi 0, %s67
      %s87 = sphi 0, %s87
      %s89 = sphi 0, %s87
      %s90 = sphi 0, %s89
      %s104 = sphi 0, %s90
      %s108 = sphi 0, %s108
      %s110 = sphi 0, %s108
      %s111 = sphi 0, %s110
      %s125 = sphi 0, %s111
      %s129 = sphi 0, %s129
      %s131 = sphi 0, %s129
      %s132 = sphi 0, %s131
      %s146 = sphi 0, %s132
      %s150 = sphi 0, %s150
      %s152 = sphi 0, %s150
      %s153 = sphi 0, %s152
      %s167 = sphi 0, %s153
      %s171 = sphi 0, %s171
      %s173 = sphi 0, %s171
      %s174 = sphi 0, %s173
      %s188 = sphi 0, %s174
      %s192 = sphi 0, %s192
      %s194 = sphi 0, %s192
      %s195 = sphi 0, %s194
      %s209 = sphi 0, %s195
      %s213 = sphi 0, %s213
      %s215 = sphi 0, %s213
      %s216 = sphi 0, %s215
      %s230 = sphi 0, %s216
      %s234 = sphi 0, %s234
      %s236 = sphi 0, %s234
      %s237 = sphi 0, %s236
      %s251 = sphi 0, %s237
      %s257 = sphi 0, %s259
      %s260 = sphi 0, %s257
      %s261 = sphi 0, %s260
      %s277 = sphi 0, %s261
    $region4: #{fc_time_embed.1} parent=1 // loop_header_branch
      %30 = sbr.rel (%p28) target = $region8
    $region5: #{fc_time_embed.1} parent=1 // loop_body
      %s32 = ssub.s32 %s27, 1
      %s33 = ssub.s32 %s27, 2
      %s34 = sadd.s32 %s27, 1
      %s35 = ssub.s32 %s27, %s34
      %p36 = scmp.eq.s32.totalorder %s35, 0
      %s38 = sadd.s32 %s37, 1
      %s39 = scalar_select %p36, %s37, %s38
      %p42 = pneg %p36
      %p43 = scmp.eq.s32.totalorder %s27, 1
      %p44 = por %p42, %p43
      %p45 = scmp.ne.s32.totalorder %s37, %s40
      %p46 = scmp.eq.s32.totalorder %s27, 0
      %p47 = por %p45, %p46
      %p48 = scmp.ne.s32.totalorder %s37, %s40
      %p49 = scmp.eq.s32.totalorder %s32, 1
      %p50 = por %p48, %p49
      %p51 = scmp.ne.s32.totalorder %s40, %s41
      %p52 = scmp.eq.s32.totalorder %s32, 0
      %p53 = por %p51, %p52
      %p54 = scmp.ne.s32.totalorder %s40, %s41
      %p55 = scmp.eq.s32.totalorder %s33, 1
      %p56 = por %p54, %p55
      %p58 = scmp.ne.s32.totalorder %s41, %s57
      %p59 = scmp.eq.s32.totalorder %s33, 0
      %p60 = por %p58, %p59
      %s61 = ssub.s32 %s27, %s34
      %p62 = scmp.eq.s32.totalorder %s61, 0
      %s64 = sadd.s32 %s63, 1
      %s65 = scalar_select %p62, %s63, %s64
      %p68 = pneg %p62
      %p69 = scmp.eq.s32.totalorder %s27, 1
      %p70 = por %p68, %p69
      %p71 = scmp.ne.s32.totalorder %s63, %s66
      %p72 = scmp.eq.s32.totalorder %s27, 0
      %p73 = por %p71, %p72
      %p74 = scmp.ne.s32.totalorder %s63, %s66
      %p75 = scmp.eq.s32.totalorder %s32, 1
      %p76 = por %p74, %p75
      %p77 = scmp.ne.s32.totalorder %s66, %s67
      %p78 = scmp.eq.s32.totalorder %s32, 0
      %p79 = por %p77, %p78
      %p80 = scmp.ne.s32.totalorder %s66, %s67
      %p81 = scmp.eq.s32.totalorder %s33, 1
      %p82 = por %p80, %p81
      %p84 = scmp.ne.s32.totalorder %s67, %s83
      %p85 = scmp.eq.s32.totalorder %s33, 0
      %p86 = por %p84, %p85
      %s88 = sadd.s32 %s87, 1
      %p91 = scmp.eq.s32.totalorder %s27, 1
      %p92 = scmp.ne.s32.totalorder %s87, %s89
      %p93 = scmp.eq.s32.totalorder %s27, 0
      %p94 = por %p92, %p93
      %p95 = scmp.ne.s32.totalorder %s87, %s89
      %p96 = scmp.eq.s32.totalorder %s32, 1
      %p97 = por %p95, %p96
      %p98 = scmp.ne.s32.totalorder %s89, %s90
      %p99 = scmp.eq.s32.totalorder %s32, 0
      %p100 = por %p98, %p99
      %p101 = scmp.ne.s32.totalorder %s89, %s90
      %p102 = scmp.eq.s32.totalorder %s33, 1
      %p103 = por %p101, %p102
      %p105 = scmp.ne.s32.totalorder %s90, %s104
      %p106 = scmp.eq.s32.totalorder %s33, 0
      %p107 = por %p105, %p106
      %s109 = sadd.s32 %s108, 1
      %p112 = scmp.eq.s32.totalorder %s27, 1
      %p113 = scmp.ne.s32.totalorder %s108, %s110
      %p114 = scmp.eq.s32.totalorder %s27, 0
      %p115 = por %p113, %p114
      %p116 = scmp.ne.s32.totalorder %s108, %s110
      %p117 = scmp.eq.s32.totalorder %s32, 1
      %p118 = por %p116, %p117
      %p119 = scmp.ne.s32.totalorder %s110, %s111
      %p120 = scmp.eq.s32.totalorder %s32, 0
      %p121 = por %p119, %p120
      %p122 = scmp.ne.s32.totalorder %s110, %s111
      %p123 = scmp.eq.s32.totalorder %s33, 1
      %p124 = por %p122, %p123
      %p126 = scmp.ne.s32.totalorder %s111, %s125
      %p127 = scmp.eq.s32.totalorder %s33, 0
      %p128 = por %p126, %p127
      %s130 = sadd.s32 %s129, 1
      %p133 = scmp.eq.s32.totalorder %s27, 1
      %p134 = scmp.ne.s32.totalorder %s129, %s131
      %p135 = scmp.eq.s32.totalorder %s27, 0
      %p136 = por %p134, %p135
      %p137 = scmp.ne.s32.totalorder %s129, %s131
      %p138 = scmp.eq.s32.totalorder %s32, 1
      %p139 = por %p137, %p138
      %p140 = scmp.ne.s32.totalorder %s131, %s132
      %p141 = scmp.eq.s32.totalorder %s32, 0
      %p142 = por %p140, %p141
      %p143 = scmp.ne.s32.totalorder %s131, %s132
      %p144 = scmp.eq.s32.totalorder %s33, 1
      %p145 = por %p143, %p144
      %p147 = scmp.ne.s32.totalorder %s132, %s146
      %p148 = scmp.eq.s32.totalorder %s33, 0
      %p149 = por %p147, %p148
      %s151 = sadd.s32 %s150, 1
      %p154 = scmp.eq.s32.totalorder %s27, 1
      %p155 = scmp.ne.s32.totalorder %s150, %s152
      %p156 = scmp.eq.s32.totalorder %s27, 0
      %p157 = por %p155, %p156
      %p158 = scmp.ne.s32.totalorder %s150, %s152
      %p159 = scmp.eq.s32.totalorder %s32, 1
      %p160 = por %p158, %p159
      %p161 = scmp.ne.s32.totalorder %s152, %s153
      %p162 = scmp.eq.s32.totalorder %s32, 0
      %p163 = por %p161, %p162
      %p164 = scmp.ne.s32.totalorder %s152, %s153
      %p165 = scmp.eq.s32.totalorder %s33, 1
      %p166 = por %p164, %p165
      %p168 = scmp.ne.s32.totalorder %s153, %s167
      %p169 = scmp.eq.s32.totalorder %s33, 0
      %p170 = por %p168, %p169
      %s172 = sadd.s32 %s171, 1
      %p175 = scmp.eq.s32.totalorder %s27, 1
      %p176 = scmp.ne.s32.totalorder %s171, %s173
      %p177 = scmp.eq.s32.totalorder %s27, 0
      %p178 = por %p176, %p177
      %p179 = scmp.ne.s32.totalorder %s171, %s173
      %p180 = scmp.eq.s32.totalorder %s32, 1
      %p181 = por %p179, %p180
      %p182 = scmp.ne.s32.totalorder %s173, %s174
      %p183 = scmp.eq.s32.totalorder %s32, 0
      %p184 = por %p182, %p183
      %p185 = scmp.ne.s32.totalorder %s173, %s174
      %p186 = scmp.eq.s32.totalorder %s33, 1
      %p187 = por %p185, %p186
      %p189 = scmp.ne.s32.totalorder %s174, %s188
      %p190 = scmp.eq.s32.totalorder %s33, 0
      %p191 = por %p189, %p190
      %s193 = sadd.s32 %s192, 1
      %p196 = scmp.eq.s32.totalorder %s27, 1
      %p197 = scmp.ne.s32.totalorder %s192, %s194
      %p198 = scmp.eq.s32.totalorder %s27, 0
      %p199 = por %p197, %p198
      %p200 = scmp.ne.s32.totalorder %s192, %s194
      %p201 = scmp.eq.s32.totalorder %s32, 1
      %p202 = por %p200, %p201
      %p203 = scmp.ne.s32.totalorder %s194, %s195
      %p204 = scmp.eq.s32.totalorder %s32, 0
      %p205 = por %p203, %p204
      %p206 = scmp.ne.s32.totalorder %s194, %s195
      %p207 = scmp.eq.s32.totalorder %s33, 1
      %p208 = por %p206, %p207
      %p210 = scmp.ne.s32.totalorder %s195, %s209
      %p211 = scmp.eq.s32.totalorder %s33, 0
      %p212 = por %p210, %p211
      %s214 = sadd.s32 %s213, 1
      %p217 = scmp.eq.s32.totalorder %s27, 1
      %p218 = scmp.ne.s32.totalorder %s213, %s215
      %p219 = scmp.eq.s32.totalorder %s27, 0
      %p220 = por %p218, %p219
      %p221 = scmp.ne.s32.totalorder %s213, %s215
      %p222 = scmp.eq.s32.totalorder %s32, 1
      %p223 = por %p221, %p222
      %p224 = scmp.ne.s32.totalorder %s215, %s216
      %p225 = scmp.eq.s32.totalorder %s32, 0
      %p226 = por %p224, %p225
      %p227 = scmp.ne.s32.totalorder %s215, %s216
      %p228 = scmp.eq.s32.totalorder %s33, 1
      %p229 = por %p227, %p228
      %p231 = scmp.ne.s32.totalorder %s216, %s230
      %p232 = scmp.eq.s32.totalorder %s33, 0
      %p233 = por %p231, %p232
      %s235 = sadd.s32 %s234, 1
      %p238 = scmp.eq.s32.totalorder %s27, 1
      %p239 = scmp.ne.s32.totalorder %s234, %s236
      %p240 = scmp.eq.s32.totalorder %s27, 0
      %p241 = por %p239, %p240
      %p242 = scmp.ne.s32.totalorder %s234, %s236
      %p243 = scmp.eq.s32.totalorder %s32, 1
      %p244 = por %p242, %p243
      %p245 = scmp.ne.s32.totalorder %s236, %s237
      %p246 = scmp.eq.s32.totalorder %s32, 0
      %p247 = por %p245, %p246
      %p248 = scmp.ne.s32.totalorder %s236, %s237
      %p249 = scmp.eq.s32.totalorder %s33, 1
      %p250 = por %p248, %p249
      %p252 = scmp.ne.s32.totalorder %s237, %s251
      %p253 = scmp.eq.s32.totalorder %s33, 0
      %p254 = por %p252, %p253
      %s255 = ssub.s32 %s27, %s34
      %p256 = scmp.eq.s32.totalorder %s255, 0
      %s258 = sadd.s32 %s257, 1
      %s259 = scalar_select %p256, %s257, %s258
      %p262 = pneg %p256
      %p263 = scmp.eq.s32.totalorder %s27, 1
      %p264 = por %p262, %p263
      %p265 = scmp.ne.s32.totalorder %s257, %s260
      %p266 = scmp.eq.s32.totalorder %s27, 0
      %p267 = por %p265, %p266
      %p268 = scmp.ne.s32.totalorder %s257, %s260
      %p269 = scmp.eq.s32.totalorder %s32, 1
      %p270 = por %p268, %p269
      %p271 = scmp.ne.s32.totalorder %s260, %s261
      %p272 = scmp.eq.s32.totalorder %s32, 0
      %p273 = por %p271, %p272
      %p274 = scmp.ne.s32.totalorder %s260, %s261
      %p275 = scmp.eq.s32.totalorder %s33, 1
      %p276 = por %p274, %p275
      %p278 = scmp.ne.s32.totalorder %s261, %s277
      %p279 = scmp.eq.s32.totalorder %s33, 0
      %p280 = por %p278, %p279
      %p281 = scmp.le.s32.totalorder 1, %s27
      %p282 = scmp.lt.s32.totalorder %s27, 3
      %p283 = pnand %p281, %p282
      %p284 = pneg %p283
      // Predicated region
      $region9: #{fc_time_embed.1} parent=5 // pred_check
        _
      $region10: #{fc_time_embed.1} parent=5 // pred_check_branch
        %286 = sbr.rel (%p283) target = $region12
      $region11: #{fc_time_embed.1} parent=5 // pred_region
        %s287 = ssub.s32 %s27, 1
        // Predicated region
        $region13: #{fc_time_embed.1} parent=11 // pred_check
          %p288 = pneg %p100
        $region14: #{fc_time_embed.1} parent=11 // pred_check_branch
          %290 = sbr.rel (%p288) target = $region16
        $region15: #{fc_time_embed.1} parent=11 // pred_region
          _
        $region16: #{fc_time_embed.1} parent=11 // pred_fallthru
          _
        // Predicated region
        $region17: #{fc_time_embed.1} parent=11 // pred_check
          %p291 = pneg %p121
        $region18: #{fc_time_embed.1} parent=11 // pred_check_branch
          %293 = sbr.rel (%p291) target = $region20
        $region19: #{fc_time_embed.1} parent=11 // pred_region
          %295 = vsyncadd [#allocation6], 0
          %s297 = sshll.u32 %s3, 4
          %s298 = int_to_ptr.hbm [resolvable:$true] %s297
          %s299 = sshll.u32 [#allocation7], 4
          %s300 = int_to_ptr.vmem [resolvable:$true] %s299
          %302 = dma.hbm_to_vmem [thread:$0]  %s298, 16, %s300, [#allocation6]
        $region20: #{fc_time_embed.1} parent=11 // pred_fallthru
          _
        // Predicated region
        $region21: #{fc_time_embed.1} parent=11 // pred_check
          %p303 = pneg %p142
        $region22: #{fc_time_embed.1} parent=11 // pred_check_branch
          %305 = sbr.rel (%p303) target = $region24
        $region23: #{fc_time_embed.1} parent=11 // pred_region
          %307 = vsyncadd [#allocation9], 0
          %s308 = sshll.u32 %s4, 4
          %s309 = int_to_ptr.hbm [resolvable:$true] %s308
          %s310 = sshll.u32 [#allocation8], 4
          %s311 = int_to_ptr.vmem [resolvable:$true] %s310
          %316 = dma.hbm_to_vmem [thread:$0]  %s309, 4096, %s311, [#allocation9], 128, 128, 8
        $region24: #{fc_time_embed.1} parent=11 // pred_fallthru
          _
        // Predicated region
        $region25: #{fc_time_embed.1} parent=11 // pred_check
          %p317 = pneg %p163
        $region26: #{fc_time_embed.1} parent=11 // pred_check_branch
          %319 = sbr.rel (%p317) target = $region28
        $region27: #{fc_time_embed.1} parent=11 // pred_region
          _
        $region28: #{fc_time_embed.1} parent=11 // pred_fallthru
          _
        // Predicated region
        $region29: #{fc_time_embed.1} parent=11 // pred_check
          %p320 = pneg %p184
        $region30: #{fc_time_embed.1} parent=11 // pred_check_branch
          %322 = sbr.rel (%p320) target = $region32
        $region31: #{fc_time_embed.1} parent=11 // pred_region
          _
        $region32: #{fc_time_embed.1} parent=11 // pred_fallthru
          _
        // Predicated region
        $region33: #{fc_time_embed.1} parent=11 // pred_check
          %p323 = pneg %p205
        $region34: #{fc_time_embed.1} parent=11 // pred_check_branch
          %325 = sbr.rel (%p323) target = $region36
        $region35: #{fc_time_embed.1} parent=11 // pred_region
          %327 = vsyncadd [#allocation9], 0
          %s329 = sshll.u32 %s7, 4
          %s330 = int_to_ptr.hbm [resolvable:$true] %s329
          %s331 = sshll.u32 [#allocation10], 4
          %s332 = int_to_ptr.vmem [resolvable:$true] %s331
          %334 = dma.hbm_to_vmem [thread:$0]  %s330, 16, %s332, [#allocation9]
        $region36: #{fc_time_embed.1} parent=11 // pred_fallthru
          _
        // Predicated region
        $region37: #{fc_time_embed.1} parent=11 // pred_check
          %p335 = pneg %p226
        $region38: #{fc_time_embed.1} parent=11 // pred_check_branch
          %337 = sbr.rel (%p335) target = $region40
        $region39: #{fc_time_embed.1} parent=11 // pred_region
          %339 = vsyncadd [#allocation12], 0
          %s340 = sshll.u32 %s8, 4
          %s341 = int_to_ptr.hbm [resolvable:$true] %s340
          %s342 = sshll.u32 [#allocation11], 4
          %s343 = int_to_ptr.vmem [resolvable:$true] %s342
          %348 = dma.hbm_to_vmem [thread:$0]  %s341, 2048, %s343, [#allocation12], 128, 128, 8
        $region40: #{fc_time_embed.1} parent=11 // pred_fallthru
          _
        // Predicated region
        $region41: #{fc_time_embed.1} parent=11 // pred_check
          %p349 = pneg %p247
        $region42: #{fc_time_embed.1} parent=11 // pred_check_branch
          %351 = sbr.rel (%p349) target = $region44
        $region43: #{fc_time_embed.1} parent=11 // pred_region
          _
        $region44: #{fc_time_embed.1} parent=11 // pred_fallthru
          _
      $region12: #{fc_time_embed.1} parent=5 // pred_fallthru
        _
      %p352 = scmp.lt.s32.totalorder %s27, 2
      // Predicated region
      $region45: #{fc_time_embed.1} parent=5 // pred_check
        %p353 = pneg %p352
      $region46: #{fc_time_embed.1} parent=5 // pred_check_branch
        %355 = sbr.rel (%p353) target = $region48
      $region47: #{fc_time_embed.1} parent=5 // pred_region
        // Predicated region
        $region49: #{fc_time_embed.1} parent=47 // pred_check
          %p356 = pneg %p47
        $region50: #{fc_time_embed.1} parent=47 // pred_check_branch
          %358 = sbr.rel (%p356) target = $region52
        $region51: #{fc_time_embed.1} parent=47 // pred_region
          %s359 = sand.u32 %s37, 1
          %s360 = scalar_lea.sflag [#allocation3], %s359
          %s361 = sand.u32 %s37, 1
          %s362 = smul.addr %s361, 256
          %s363 = scalar_lea.vmem [#allocation2], %s362
          %s364 = smul.u32 32, %s27
          %366 = vsyncadd %s360, 0
          %s367 = smul.addr %s364, 8
          %s368 = scalar_lea.hbm %s0, %s367
          %s369 = sshll.u32 %s368, 4
          %s370 = int_to_ptr.hbm [resolvable:$true] %s369
          %s371 = sshll.u32 %s363, 4
          %s372 = int_to_ptr.vmem [resolvable:$true] %s371
          %377 = dma.hbm_to_vmem [thread:$0]  %s370, 4096, %s372, %s360, 128, 128, 8
        $region52: #{fc_time_embed.1} parent=47 // pred_fallthru
          _
        // Predicated region
        $region53: #{fc_time_embed.1} parent=47 // pred_check
          %p378 = pneg %p73
        $region54: #{fc_time_embed.1} parent=47 // pred_check_branch
          %380 = sbr.rel (%p378) target = $region56
        $region55: #{fc_time_embed.1} parent=47 // pred_region
          %s381 = sand.u32 %s27, 1
          %s382 = scalar_lea.sflag [#allocation6], %s381
          %s383 = sand.u32 %s63, 1
          %s384 = smul.addr %s383, 256
          %s385 = scalar_lea.vmem [#allocation5], %s384
          %s386 = smul.u32 32, %s27
          %388 = vsyncadd %s382, 0
          %s389 = smul.addr %s386, 8
          %s390 = scalar_lea.hbm %s1, %s389
          %s391 = sshll.u32 %s390, 4
          %s392 = int_to_ptr.hbm [resolvable:$true] %s391
          %s393 = sshll.u32 %s385, 4
          %s394 = int_to_ptr.vmem [resolvable:$true] %s393
          %399 = dma.hbm_to_vmem [thread:$0]  %s392, 4096, %s394, %s382, 128, 128, 8
        $region56: #{fc_time_embed.1} parent=47 // pred_fallthru
          _
      $region48: #{fc_time_embed.1} parent=5 // pred_fallthru
        _
      %p400 = scmp.le.s32.totalorder 1, %s27
      %p401 = scmp.lt.s32.totalorder %s27, 3
      %p402 = pnand %p400, %p401
      %p403 = pneg %p402
      // Predicated region
      $region57: #{fc_time_embed.1} parent=5 // pred_check
        _
      $region58: #{fc_time_embed.1} parent=5 // pred_check_branch
        %405 = sbr.rel (%p402) target = $region60
      $region59: #{fc_time_embed.1} parent=5 // pred_region
        %s406 = ssub.s32 %s27, 1
        %s407 = sand.u32 %s40, 1
        %s408 = scalar_lea.sflag [#allocation3], %s407
        %s409 = sand.u32 %s40, 1
        %s410 = smul.addr %s409, 256
        %s411 = scalar_lea.vmem [#allocation2], %s410
        // Predicated region
        $region61: #{fc_time_embed.1} parent=59 // pred_check
          %p412 = pneg %p53
        $region62: #{fc_time_embed.1} parent=59 // pred_check_branch
          %414 = sbr.rel (%p412) target = $region64
        $region63: #{fc_time_embed.1} parent=59 // pred_region
          %416 = dma.done %s408, 4096
        $region64: #{fc_time_embed.1} parent=59 // pred_fallthru
          _
        %s417 = sand.u32 %s32, 1
        %s418 = scalar_lea.sflag [#allocation6], %s417
        %s419 = sand.u32 %s66, 1
        %s420 = smul.addr %s419, 256
        %s421 = scalar_lea.vmem [#allocation5], %s420
        // Predicated region
        $region65: #{fc_time_embed.1} parent=59 // pred_check
          %p422 = pneg %p79
        $region66: #{fc_time_embed.1} parent=59 // pred_check_branch
          %424 = sbr.rel (%p422) target = $region68
        $region67: #{fc_time_embed.1} parent=59 // pred_region
          %426 = dma.done %s418, 4096
        $region68: #{fc_time_embed.1} parent=59 // pred_fallthru
          _
        // Predicated region
        $region69: #{fc_time_embed.1} parent=59 // pred_check
          %p427 = pneg %p121
        $region70: #{fc_time_embed.1} parent=59 // pred_check_branch
          %429 = sbr.rel (%p427) target = $region72
        $region71: #{fc_time_embed.1} parent=59 // pred_region
          %431 = dma.done [#allocation6], 16
        $region72: #{fc_time_embed.1} parent=59 // pred_fallthru
          _
        // Predicated region
        $region73: #{fc_time_embed.1} parent=59 // pred_check
          %p432 = pneg %p142
        $region74: #{fc_time_embed.1} parent=59 // pred_check_branch
          %434 = sbr.rel (%p432) target = $region76
        $region75: #{fc_time_embed.1} parent=59 // pred_region
          %436 = dma.done [#allocation9], 4096
        $region76: #{fc_time_embed.1} parent=59 // pred_fallthru
          _
        // Predicated region
        $region77: #{fc_time_embed.1} parent=59 // pred_check
          %p437 = pneg %p205
        $region78: #{fc_time_embed.1} parent=59 // pred_check_branch
          %439 = sbr.rel (%p437) target = $region80
        $region79: #{fc_time_embed.1} parent=59 // pred_region
          %441 = dma.done [#allocation9], 16
        $region80: #{fc_time_embed.1} parent=59 // pred_fallthru
          _
        // Predicated region
        $region81: #{fc_time_embed.1} parent=59 // pred_check
          %p442 = pneg %p226
        $region82: #{fc_time_embed.1} parent=59 // pred_check_branch
          %444 = sbr.rel (%p442) target = $region84
        $region83: #{fc_time_embed.1} parent=59 // pred_region
          %446 = dma.done [#allocation12], 2048
        $region84: #{fc_time_embed.1} parent=59 // pred_fallthru
          _
        %s447 = sand.u32 %s40, 1
        %s448 = scalar_lea.sflag [#allocation3], %s447
        %s449 = sand.u32 %s40, 1
        %s450 = smul.addr %s449, 256
        %s451 = scalar_lea.vmem [#allocation2], %s450
        %p452 = pneg %p53
        %p453 = pneg %p50
        %s454 = sand.u32 %s32, 1
        %s455 = scalar_lea.sflag [#allocation6], %s454
        %s456 = sand.u32 %s66, 1
        %s457 = smul.addr %s456, 256
        %s458 = scalar_lea.vmem [#allocation5], %s457
        %p459 = pneg %p79
        %p460 = pneg %p76
        %p461 = pneg %p100
        %p462 = pneg %p97
        %p463 = pneg %p121
        %p464 = pneg %p118
        %p465 = pneg %p142
        %p466 = pneg %p139
        %p467 = pneg %p163
        %p468 = pneg %p160
        %p469 = pneg %p184
        %p470 = pneg %p181
        %p471 = pneg %p205
        %p472 = pneg %p202
        %p473 = pneg %p226
        %p474 = pneg %p223
        %p475 = pneg %p247
        %p476 = pneg %p244
        %p477 = pneg %p273
        %p478 = pneg %p270
        %s479 = sand.u32 %s260, 1
        %s480 = scalar_lea.sflag [#allocation4], %s479
        %s481 = sand.u32 %s260, 1
        %s482 = smul.addr %s481, 256
        %s483 = scalar_lea.vmem [#allocation13], %s482
        %s484 = smul.u32 32, %s32
        %s485 = smul.u32 32, %s32
        %s486 = smul.u32 32, %s32
        %v487 = vld [vmem:[%s411] sm:$0xff]
        %v488 = vld [vmem:[%s411 + $0x8] sm:$0xff]
        %v489 = vld [vmem:[%s411 + $0x10] sm:$0xff]
        %v490 = vld [vmem:[%s411 + $0x18] sm:$0xff]
        %v491 = vld [vmem:[%s411 + $0x20] sm:$0xff]
        %v492 = vld [vmem:[%s411 + $0x28] sm:$0xff]
        %v493 = vld [vmem:[%s411 + $0x30] sm:$0xff]
        %v494 = vld [vmem:[%s411 + $0x38] sm:$0xff]
        %v495 = vld [vmem:[%s411 + $0x40] sm:$0xff]
        %v496 = vld [vmem:[%s411 + $0x48] sm:$0xff]
        %v497 = vld [vmem:[%s411 + $0x50] sm:$0xff]
        %v498 = vld [vmem:[%s411 + $0x58] sm:$0xff]
        %v499 = vld [vmem:[%s411 + $0x60] sm:$0xff]
        %v500 = vld [vmem:[%s411 + $0x68] sm:$0xff]
        %v501 = vld [vmem:[%s411 + $0x70] sm:$0xff]
        %v502 = vld [vmem:[%s411 + $0x78] sm:$0xff]
        %v503 = vld [vmem:[%s411 + $0x80] sm:$0xff]
        %v504 = vld [vmem:[%s411 + $0x88] sm:$0xff]
        %v505 = vld [vmem:[%s411 + $0x90] sm:$0xff]
        %v506 = vld [vmem:[%s411 + $0x98] sm:$0xff]
        %v507 = vld [vmem:[%s411 + $0xa0] sm:$0xff]
        %v508 = vld [vmem:[%s411 + $0xa8] sm:$0xff]
        %v509 = vld [vmem:[%s411 + $0xb0] sm:$0xff]
        %v510 = vld [vmem:[%s411 + $0xb8] sm:$0xff]
        %v511 = vld [vmem:[%s411 + $0xc0] sm:$0xff]
        %v512 = vld [vmem:[%s411 + $0xc8] sm:$0xff]
        %v513 = vld [vmem:[%s411 + $0xd0] sm:$0xff]
        %v514 = vld [vmem:[%s411 + $0xd8] sm:$0xff]
        %v515 = vld [vmem:[%s411 + $0xe0] sm:$0xff]
        %v516 = vld [vmem:[%s411 + $0xe8] sm:$0xff]
        %v517 = vld [vmem:[%s411 + $0xf0] sm:$0xff]
        %v518 = vld [vmem:[%s411 + $0xf8] sm:$0xff]
        %519 = vadd.xlane.f32.xlu0 %v487
        %v520 = vpop.xlane.xlu0 %519
        %521 = vadd.xlane.f32.xlu0 %v488
        %v522 = vpop.xlane.xlu0 %521
        %523 = vadd.xlane.f32.xlu0 %v489
        %v524 = vpop.xlane.xlu0 %523
        %525 = vadd.xlane.f32.xlu0 %v490
        %v526 = vpop.xlane.xlu0 %525
        %527 = vadd.xlane.f32.xlu0 %v491
        %v528 = vpop.xlane.xlu0 %527
        %529 = vadd.xlane.f32.xlu0 %v492
        %v530 = vpop.xlane.xlu0 %529
        %531 = vadd.xlane.f32.xlu0 %v493
        %v532 = vpop.xlane.xlu0 %531
        %533 = vadd.xlane.f32.xlu0 %v494
        %v534 = vpop.xlane.xlu0 %533
        %535 = vadd.xlane.f32.xlu0 %v495
        %v536 = vpop.xlane.xlu0 %535
        %537 = vadd.xlane.f32.xlu0 %v496
        %v538 = vpop.xlane.xlu0 %537
        %539 = vadd.xlane.f32.xlu0 %v497
        %v540 = vpop.xlane.xlu0 %539
        %541 = vadd.xlane.f32.xlu0 %v498
        %v542 = vpop.xlane.xlu0 %541
        %543 = vadd.xlane.f32.xlu0 %v499
        %v544 = vpop.xlane.xlu0 %543
        %545 = vadd.xlane.f32.xlu0 %v500
        %v546 = vpop.xlane.xlu0 %545
        %547 = vadd.xlane.f32.xlu0 %v501
        %v548 = vpop.xlane.xlu0 %547
        %549 = vadd.xlane.f32.xlu0 %v502
        %v550 = vpop.xlane.xlu0 %549
        %551 = vadd.xlane.f32.xlu0 %v503
        %v552 = vpop.xlane.xlu0 %551
        %553 = vadd.xlane.f32.xlu0 %v504
        %v554 = vpop.xlane.xlu0 %553
        %555 = vadd.xlane.f32.xlu0 %v505
        %v556 = vpop.xlane.xlu0 %555
        %557 = vadd.xlane.f32.xlu0 %v506
        %v558 = vpop.xlane.xlu0 %557
        %559 = vadd.xlane.f32.xlu0 %v507
        %v560 = vpop.xlane.xlu0 %559
        %561 = vadd.xlane.f32.xlu0 %v508
        %v562 = vpop.xlane.xlu0 %561
        %563 = vadd.xlane.f32.xlu0 %v509
        %v564 = vpop.xlane.xlu0 %563
        %565 = vadd.xlane.f32.xlu0 %v510
        %v566 = vpop.xlane.xlu0 %565
        %567 = vadd.xlane.f32.xlu0 %v511
        %v568 = vpop.xlane.xlu0 %567
        %569 = vadd.xlane.f32.xlu0 %v512
        %v570 = vpop.xlane.xlu0 %569
        %571 = vadd.xlane.f32.xlu0 %v513
        %v572 = vpop.xlane.xlu0 %571
        %573 = vadd.xlane.f32.xlu0 %v514
        %v574 = vpop.xlane.xlu0 %573
        %575 = vadd.xlane.f32.xlu0 %v515
        %v576 = vpop.xlane.xlu0 %575
        %577 = vadd.xlane.f32.xlu0 %v516
        %v578 = vpop.xlane.xlu0 %577
        %579 = vadd.xlane.f32.xlu0 %v517
        %v580 = vpop.xlane.xlu0 %579
        %581 = vadd.xlane.f32.xlu0 %v518
        %v582 = vpop.xlane.xlu0 %581
        %v583 = vrcp.pop 128.0
        %v584 = vmul.f32 128.0, %v583
        %v585 = vsub.f32 1.0, %v584
        %v586 = vmul.f32 %v583, %v585
        %v587 = vadd.f32 %v583, %v586
        %vm588 = vweird.f32 %v583
        %v589 = vsel %vm588, %v583, %v587
        %v590 = vmul.f32 %v520, %v589
        %v591 = vmul.f32 %v522, %v589
        %v592 = vmul.f32 %v524, %v589
        %v593 = vmul.f32 %v526, %v589
        %v594 = vmul.f32 %v528, %v589
        %v595 = vmul.f32 %v530, %v589
        %v596 = vmul.f32 %v532, %v589
        %v597 = vmul.f32 %v534, %v589
        %v598 = vmul.f32 %v536, %v589
        %v599 = vmul.f32 %v538, %v589
        %v600 = vmul.f32 %v540, %v589
        %v601 = vmul.f32 %v542, %v589
        %v602 = vmul.f32 %v544, %v589
        %v603 = vmul.f32 %v546, %v589
        %v604 = vmul.f32 %v548, %v589
        %v605 = vmul.f32 %v550, %v589
        %v606 = vmul.f32 %v552, %v589
        %v607 = vmul.f32 %v554, %v589
        %v608 = vmul.f32 %v556, %v589
        %v609 = vmul.f32 %v558, %v589
        %v610 = vmul.f32 %v560, %v589
        %v611 = vmul.f32 %v562, %v589
        %v612 = vmul.f32 %v564, %v589
        %v613 = vmul.f32 %v566, %v589
        %v614 = vmul.f32 %v568, %v589
        %v615 = vmul.f32 %v570, %v589
        %v616 = vmul.f32 %v572, %v589
        %v617 = vmul.f32 %v574, %v589
        %v618 = vmul.f32 %v576, %v589
        %v619 = vmul.f32 %v578, %v589
        %v620 = vmul.f32 %v580, %v589
        %v621 = vmul.f32 %v582, %v589
        %v622 = vsub.f32 %v487, %v590
        %v623 = vsub.f32 %v488, %v591
        %v624 = vsub.f32 %v489, %v592
        %v625 = vsub.f32 %v490, %v593
        %v626 = vsub.f32 %v491, %v594
        %v627 = vsub.f32 %v492, %v595
        %v628 = vsub.f32 %v493, %v596
        %v629 = vsub.f32 %v494, %v597
        %v630 = vsub.f32 %v495, %v598
        %v631 = vsub.f32 %v496, %v599
        %v632 = vsub.f32 %v497, %v600
        %v633 = vsub.f32 %v498, %v601
        %v634 = vsub.f32 %v499, %v602
        %v635 = vsub.f32 %v500, %v603
        %v636 = vsub.f32 %v501, %v604
        %v637 = vsub.f32 %v502, %v605
        %v638 = vsub.f32 %v503, %v606
        %v639 = vsub.f32 %v504, %v607
        %v640 = vsub.f32 %v505, %v608
        %v641 = vsub.f32 %v506, %v609
        %v642 = vsub.f32 %v507, %v610
        %v643 = vsub.f32 %v508, %v611
        %v644 = vsub.f32 %v509, %v612
        %v645 = vsub.f32 %v510, %v613
        %v646 = vsub.f32 %v511, %v614
        %v647 = vsub.f32 %v512, %v615
        %v648 = vsub.f32 %v513, %v616
        %v649 = vsub.f32 %v514, %v617
        %v650 = vsub.f32 %v515, %v618
        %v651 = vsub.f32 %v516, %v619
        %v652 = vsub.f32 %v517, %v620
        %v653 = vsub.f32 %v518, %v621
        %v654 = vmul.f32 %v622, %v622
        %v655 = vmul.f32 %v623, %v623
        %v656 = vmul.f32 %v624, %v624
        %v657 = vmul.f32 %v625, %v625
        %v658 = vmul.f32 %v626, %v626
        %v659 = vmul.f32 %v627, %v627
        %v660 = vmul.f32 %v628, %v628
        %v661 = vmul.f32 %v629, %v629
        %v662 = vmul.f32 %v630, %v630
        %v663 = vmul.f32 %v631, %v631
        %v664 = vmul.f32 %v632, %v632
        %v665 = vmul.f32 %v633, %v633
        %v666 = vmul.f32 %v634, %v634
        %v667 = vmul.f32 %v635, %v635
        %v668 = vmul.f32 %v636, %v636
        %v669 = vmul.f32 %v637, %v637
        %v670 = vmul.f32 %v638, %v638
        %v671 = vmul.f32 %v639, %v639
        %v672 = vmul.f32 %v640, %v640
        %v673 = vmul.f32 %v641, %v641
        %v674 = vmul.f32 %v642, %v642
        %v675 = vmul.f32 %v643, %v643
        %v676 = vmul.f32 %v644, %v644
        %v677 = vmul.f32 %v645, %v645
        %v678 = vmul.f32 %v646, %v646
        %v679 = vmul.f32 %v647, %v647
        %v680 = vmul.f32 %v648, %v648
        %v681 = vmul.f32 %v649, %v649
        %v682 = vmul.f32 %v650, %v650
        %v683 = vmul.f32 %v651, %v651
        %v684 = vmul.f32 %v652, %v652
        %v685 = vmul.f32 %v653, %v653
        %686 = vadd.xlane.f32.xlu0 %v654
        %v687 = vpop.xlane.xlu0 %686
        %688 = vadd.xlane.f32.xlu0 %v655
        %v689 = vpop.xlane.xlu0 %688
        %690 = vadd.xlane.f32.xlu0 %v656
        %v691 = vpop.xlane.xlu0 %690
        %692 = vadd.xlane.f32.xlu0 %v657
        %v693 = vpop.xlane.xlu0 %692
        %694 = vadd.xlane.f32.xlu0 %v658
        %v695 = vpop.xlane.xlu0 %694
        %696 = vadd.xlane.f32.xlu0 %v659
        %v697 = vpop.xlane.xlu0 %696
        %698 = vadd.xlane.f32.xlu0 %v660
        %v699 = vpop.xlane.xlu0 %698
        %700 = vadd.xlane.f32.xlu0 %v661
        %v701 = vpop.xlane.xlu0 %700
        %702 = vadd.xlane.f32.xlu0 %v662
        %v703 = vpop.xlane.xlu0 %702
        %704 = vadd.xlane.f32.xlu0 %v663
        %v705 = vpop.xlane.xlu0 %704
        %706 = vadd.xlane.f32.xlu0 %v664
        %v707 = vpop.xlane.xlu0 %706
        %708 = vadd.xlane.f32.xlu0 %v665
        %v709 = vpop.xlane.xlu0 %708
        %710 = vadd.xlane.f32.xlu0 %v666
        %v711 = vpop.xlane.xlu0 %710
        %712 = vadd.xlane.f32.xlu0 %v667
        %v713 = vpop.xlane.xlu0 %712
        %714 = vadd.xlane.f32.xlu0 %v668
        %v715 = vpop.xlane.xlu0 %714
        %716 = vadd.xlane.f32.xlu0 %v669
        %v717 = vpop.xlane.xlu0 %716
        %718 = vadd.xlane.f32.xlu0 %v670
        %v719 = vpop.xlane.xlu0 %718
        %720 = vadd.xlane.f32.xlu0 %v671
        %v721 = vpop.xlane.xlu0 %720
        %722 = vadd.xlane.f32.xlu0 %v672
        %v723 = vpop.xlane.xlu0 %722
        %724 = vadd.xlane.f32.xlu0 %v673
        %v725 = vpop.xlane.xlu0 %724
        %726 = vadd.xlane.f32.xlu0 %v674
        %v727 = vpop.xlane.xlu0 %726
        %728 = vadd.xlane.f32.xlu0 %v675
        %v729 = vpop.xlane.xlu0 %728
        %730 = vadd.xlane.f32.xlu0 %v676
        %v731 = vpop.xlane.xlu0 %730
        %732 = vadd.xlane.f32.xlu0 %v677
        %v733 = vpop.xlane.xlu0 %732
        %734 = vadd.xlane.f32.xlu0 %v678
        %v735 = vpop.xlane.xlu0 %734
        %736 = vadd.xlane.f32.xlu0 %v679
        %v737 = vpop.xlane.xlu0 %736
        %738 = vadd.xlane.f32.xlu0 %v680
        %v739 = vpop.xlane.xlu0 %738
        %740 = vadd.xlane.f32.xlu0 %v681
        %v741 = vpop.xlane.xlu0 %740
        %742 = vadd.xlane.f32.xlu0 %v682
        %v743 = vpop.xlane.xlu0 %742
        %744 = vadd.xlane.f32.xlu0 %v683
        %v745 = vpop.xlane.xlu0 %744
        %746 = vadd.xlane.f32.xlu0 %v684
        %v747 = vpop.xlane.xlu0 %746
        %748 = vadd.xlane.f32.xlu0 %v685
        %v749 = vpop.xlane.xlu0 %748
        %v750 = vmul.f32 %v687, %v589
        %v751 = vmul.f32 %v689, %v589
        %v752 = vmul.f32 %v691, %v589
        %v753 = vmul.f32 %v693, %v589
        %v754 = vmul.f32 %v695, %v589
        %v755 = vmul.f32 %v697, %v589
        %v756 = vmul.f32 %v699, %v589
        %v757 = vmul.f32 %v701, %v589
        %v758 = vmul.f32 %v703, %v589
        %v759 = vmul.f32 %v705, %v589
        %v760 = vmul.f32 %v707, %v589
        %v761 = vmul.f32 %v709, %v589
        %v762 = vmul.f32 %v711, %v589
        %v763 = vmul.f32 %v713, %v589
        %v764 = vmul.f32 %v715, %v589
        %v765 = vmul.f32 %v717, %v589
        %v766 = vmul.f32 %v719, %v589
        %v767 = vmul.f32 %v721, %v589
        %v768 = vmul.f32 %v723, %v589
        %v769 = vmul.f32 %v725, %v589
        %v770 = vmul.f32 %v727, %v589
        %v771 = vmul.f32 %v729, %v589
        %v772 = vmul.f32 %v731, %v589
        %v773 = vmul.f32 %v733, %v589
        %v774 = vmul.f32 %v735, %v589
        %v775 = vmul.f32 %v737, %v589
        %v776 = vmul.f32 %v739, %v589
        %v777 = vmul.f32 %v741, %v589
        %v778 = vmul.f32 %v743, %v589
        %v779 = vmul.f32 %v745, %v589
        %v780 = vmul.f32 %v747, %v589
        %v781 = vmul.f32 %v749, %v589
        %v782 = vadd.f32 %v750, 1e-05
        %v783 = vadd.f32 %v751, 1e-05
        %v784 = vadd.f32 %v752, 1e-05
        %v785 = vadd.f32 %v753, 1e-05
        %v786 = vadd.f32 %v754, 1e-05
        %v787 = vadd.f32 %v755, 1e-05
        %v788 = vadd.f32 %v756, 1e-05
        %v789 = vadd.f32 %v757, 1e-05
        %v790 = vadd.f32 %v758, 1e-05
        %v791 = vadd.f32 %v759, 1e-05
        %v792 = vadd.f32 %v760, 1e-05
        %v793 = vadd.f32 %v761, 1e-05
        %v794 = vadd.f32 %v762, 1e-05
        %v795 = vadd.f32 %v763, 1e-05
        %v796 = vadd.f32 %v764, 1e-05
        %v797 = vadd.f32 %v765, 1e-05
        %v798 = vadd.f32 %v766, 1e-05
        %v799 = vadd.f32 %v767, 1e-05
        %v800 = vadd.f32 %v768, 1e-05
        %v801 = vadd.f32 %v769, 1e-05
        %v802 = vadd.f32 %v770, 1e-05
        %v803 = vadd.f32 %v771, 1e-05
        %v804 = vadd.f32 %v772, 1e-05
        %v805 = vadd.f32 %v773, 1e-05
        %v806 = vadd.f32 %v774, 1e-05
        %v807 = vadd.f32 %v775, 1e-05
        %v808 = vadd.f32 %v776, 1e-05
        %v809 = vadd.f32 %v777, 1e-05
        %v810 = vadd.f32 %v778, 1e-05
        %v811 = vadd.f32 %v779, 1e-05
        %v812 = vadd.f32 %v780, 1e-05
        %v813 = vadd.f32 %v781, 1e-05
        %v814 = vrsqrt.pop %v782
        %v815 = vmul.f32 %v814, %v782
        %v816 = vmul.f32 %v815, %v814
        %v817 = vmul.f32 0.5, %v816
        %v818 = vsub.f32 1.5, %v817
        %v819 = vmul.f32 %v814, %v818
        %vm820 = vweird.f32 %v782
        %vm821 = vweird.f32 %v814
        %vm822 = vmor %vm820, %vm821
        %v823 = vsel %vm822, %v814, %v819
        %v824 = vrsqrt.pop %v783
        %v825 = vmul.f32 %v824, %v783
        %v826 = vmul.f32 %v825, %v824
        %v827 = vmul.f32 0.5, %v826
        %v828 = vsub.f32 1.5, %v827
        %v829 = vmul.f32 %v824, %v828
        %vm830 = vweird.f32 %v783
        %vm831 = vweird.f32 %v824
        %vm832 = vmor %vm830, %vm831
        %v833 = vsel %vm832, %v824, %v829
        %v834 = vrsqrt.pop %v784
        %v835 = vmul.f32 %v834, %v784
        %v836 = vmul.f32 %v835, %v834
        %v837 = vmul.f32 0.5, %v836
        %v838 = vsub.f32 1.5, %v837
        %v839 = vmul.f32 %v834, %v838
        %vm840 = vweird.f32 %v784
        %vm841 = vweird.f32 %v834
        %vm842 = vmor %vm840, %vm841
        %v843 = vsel %vm842, %v834, %v839
        %v844 = vrsqrt.pop %v785
        %v845 = vmul.f32 %v844, %v785
        %v846 = vmul.f32 %v845, %v844
        %v847 = vmul.f32 0.5, %v846
        %v848 = vsub.f32 1.5, %v847
        %v849 = vmul.f32 %v844, %v848
        %vm850 = vweird.f32 %v785
        %vm851 = vweird.f32 %v844
        %vm852 = vmor %vm850, %vm851
        %v853 = vsel %vm852, %v844, %v849
        %v854 = vrsqrt.pop %v786
        %v855 = vmul.f32 %v854, %v786
        %v856 = vmul.f32 %v855, %v854
        %v857 = vmul.f32 0.5, %v856
        %v858 = vsub.f32 1.5, %v857
        %v859 = vmul.f32 %v854, %v858
        %vm860 = vweird.f32 %v786
        %vm861 = vweird.f32 %v854
        %vm862 = vmor %vm860, %vm861
        %v863 = vsel %vm862, %v854, %v859
        %v864 = vrsqrt.pop %v787
        %v865 = vmul.f32 %v864, %v787
        %v866 = vmul.f32 %v865, %v864
        %v867 = vmul.f32 0.5, %v866
        %v868 = vsub.f32 1.5, %v867
        %v869 = vmul.f32 %v864, %v868
        %vm870 = vweird.f32 %v787
        %vm871 = vweird.f32 %v864
        %vm872 = vmor %vm870, %vm871
        %v873 = vsel %vm872, %v864, %v869
        %v874 = vrsqrt.pop %v788
        %v875 = vmul.f32 %v874, %v788
        %v876 = vmul.f32 %v875, %v874
        %v877 = vmul.f32 0.5, %v876
        %v878 = vsub.f32 1.5, %v877
        %v879 = vmul.f32 %v874, %v878
        %vm880 = vweird.f32 %v788
        %vm881 = vweird.f32 %v874
        %vm882 = vmor %vm880, %vm881
        %v883 = vsel %vm882, %v874, %v879
        %v884 = vrsqrt.pop %v789
        %v885 = vmul.f32 %v884, %v789
        %v886 = vmul.f32 %v885, %v884
        %v887 = vmul.f32 0.5, %v886
        %v888 = vsub.f32 1.5, %v887
        %v889 = vmul.f32 %v884, %v888
        %vm890 = vweird.f32 %v789
        %vm891 = vweird.f32 %v884
        %vm892 = vmor %vm890, %vm891
        %v893 = vsel %vm892, %v884, %v889
        %v894 = vrsqrt.pop %v790
        %v895 = vmul.f32 %v894, %v790
        %v896 = vmul.f32 %v895, %v894
        %v897 = vmul.f32 0.5, %v896
        %v898 = vsub.f32 1.5, %v897
        %v899 = vmul.f32 %v894, %v898
        %vm900 = vweird.f32 %v790
        %vm901 = vweird.f32 %v894
        %vm902 = vmor %vm900, %vm901
        %v903 = vsel %vm902, %v894, %v899
        %v904 = vrsqrt.pop %v791
        %v905 = vmul.f32 %v904, %v791
        %v906 = vmul.f32 %v905, %v904
        %v907 = vmul.f32 0.5, %v906
        %v908 = vsub.f32 1.5, %v907
        %v909 = vmul.f32 %v904, %v908
        %vm910 = vweird.f32 %v791
        %vm911 = vweird.f32 %v904
        %vm912 = vmor %vm910, %vm911
        %v913 = vsel %vm912, %v904, %v909
        %v914 = vrsqrt.pop %v792
        %v915 = vmul.f32 %v914, %v792
        %v916 = vmul.f32 %v915, %v914
        %v917 = vmul.f32 0.5, %v916
        %v918 = vsub.f32 1.5, %v917
        %v919 = vmul.f32 %v914, %v918
        %vm920 = vweird.f32 %v792
        %vm921 = vweird.f32 %v914
        %vm922 = vmor %vm920, %vm921
        %v923 = vsel %vm922, %v914, %v919
        %v924 = vrsqrt.pop %v793
        %v925 = vmul.f32 %v924, %v793
        %v926 = vmul.f32 %v925, %v924
        %v927 = vmul.f32 0.5, %v926
        %v928 = vsub.f32 1.5, %v927
        %v929 = vmul.f32 %v924, %v928
        %vm930 = vweird.f32 %v793
        %vm931 = vweird.f32 %v924
        %vm932 = vmor %vm930, %vm931
        %v933 = vsel %vm932, %v924, %v929
        %v934 = vrsqrt.pop %v794
        %v935 = vmul.f32 %v934, %v794
        %v936 = vmul.f32 %v935, %v934
        %v937 = vmul.f32 0.5, %v936
        %v938 = vsub.f32 1.5, %v937
        %v939 = vmul.f32 %v934, %v938
        %vm940 = vweird.f32 %v794
        %vm941 = vweird.f32 %v934
        %vm942 = vmor %vm940, %vm941
        %v943 = vsel %vm942, %v934, %v939
        %v944 = vrsqrt.pop %v795
        %v945 = vmul.f32 %v944, %v795
        %v946 = vmul.f32 %v945, %v944
        %v947 = vmul.f32 0.5, %v946
        %v948 = vsub.f32 1.5, %v947
        %v949 = vmul.f32 %v944, %v948
        %vm950 = vweird.f32 %v795
        %vm951 = vweird.f32 %v944
        %vm952 = vmor %vm950, %vm951
        %v953 = vsel %vm952, %v944, %v949
        %v954 = vrsqrt.pop %v796
        %v955 = vmul.f32 %v954, %v796
        %v956 = vmul.f32 %v955, %v954
        %v957 = vmul.f32 0.5, %v956
        %v958 = vsub.f32 1.5, %v957
        %v959 = vmul.f32 %v954, %v958
        %vm960 = vweird.f32 %v796
        %vm961 = vweird.f32 %v954
        %vm962 = vmor %vm960, %vm961
        %v963 = vsel %vm962, %v954, %v959
        %v964 = vrsqrt.pop %v797
        %v965 = vmul.f32 %v964, %v797
        %v966 = vmul.f32 %v965, %v964
        %v967 = vmul.f32 0.5, %v966
        %v968 = vsub.f32 1.5, %v967
        %v969 = vmul.f32 %v964, %v968
        %vm970 = vweird.f32 %v797
        %vm971 = vweird.f32 %v964
        %vm972 = vmor %vm970, %vm971
        %v973 = vsel %vm972, %v964, %v969
        %v974 = vrsqrt.pop %v798
        %v975 = vmul.f32 %v974, %v798
        %v976 = vmul.f32 %v975, %v974
        %v977 = vmul.f32 0.5, %v976
        %v978 = vsub.f32 1.5, %v977
        %v979 = vmul.f32 %v974, %v978
        %vm980 = vweird.f32 %v798
        %vm981 = vweird.f32 %v974
        %vm982 = vmor %vm980, %vm981
        %v983 = vsel %vm982, %v974, %v979
        %v984 = vrsqrt.pop %v799
        %v985 = vmul.f32 %v984, %v799
        %v986 = vmul.f32 %v985, %v984
        %v987 = vmul.f32 0.5, %v986
        %v988 = vsub.f32 1.5, %v987
        %v989 = vmul.f32 %v984, %v988
        %vm990 = vweird.f32 %v799
        %vm991 = vweird.f32 %v984
        %vm992 = vmor %vm990, %vm991
        %v993 = vsel %vm992, %v984, %v989
        %v994 = vrsqrt.pop %v800
        %v995 = vmul.f32 %v994, %v800
        %v996 = vmul.f32 %v995, %v994
        %v997 = vmul.f32 0.5, %v996
        %v998 = vsub.f32 1.5, %v997
        %v999 = vmul.f32 %v994, %v998
        %vm1000 = vweird.f32 %v800
        %vm1001 = vweird.f32 %v994
        %vm1002 = vmor %vm1000, %vm1001
        %v1003 = vsel %vm1002, %v994, %v999
        %v1004 = vrsqrt.pop %v801
        %v1005 = vmul.f32 %v1004, %v801
        %v1006 = vmul.f32 %v1005, %v1004
        %v1007 = vmul.f32 0.5, %v1006
        %v1008 = vsub.f32 1.5, %v1007
        %v1009 = vmul.f32 %v1004, %v1008
        %vm1010 = vweird.f32 %v801
        %vm1011 = vweird.f32 %v1004
        %vm1012 = vmor %vm1010, %vm1011
        %v1013 = vsel %vm1012, %v1004, %v1009
        %v1014 = vrsqrt.pop %v802
        %v1015 = vmul.f32 %v1014, %v802
        %v1016 = vmul.f32 %v1015, %v1014
        %v1017 = vmul.f32 0.5, %v1016
        %v1018 = vsub.f32 1.5, %v1017
        %v1019 = vmul.f32 %v1014, %v1018
        %vm1020 = vweird.f32 %v802
        %vm1021 = vweird.f32 %v1014
        %vm1022 = vmor %vm1020, %vm1021
        %v1023 = vsel %vm1022, %v1014, %v1019
        %v1024 = vrsqrt.pop %v803
        %v1025 = vmul.f32 %v1024, %v803
        %v1026 = vmul.f32 %v1025, %v1024
        %v1027 = vmul.f32 0.5, %v1026
        %v1028 = vsub.f32 1.5, %v1027
        %v1029 = vmul.f32 %v1024, %v1028
        %vm1030 = vweird.f32 %v803
        %vm1031 = vweird.f32 %v1024
        %vm1032 = vmor %vm1030, %vm1031
        %v1033 = vsel %vm1032, %v1024, %v1029
        %v1034 = vrsqrt.pop %v804
        %v1035 = vmul.f32 %v1034, %v804
        %v1036 = vmul.f32 %v1035, %v1034
        %v1037 = vmul.f32 0.5, %v1036
        %v1038 = vsub.f32 1.5, %v1037
        %v1039 = vmul.f32 %v1034, %v1038
        %vm1040 = vweird.f32 %v804
        %vm1041 = vweird.f32 %v1034
        %vm1042 = vmor %vm1040, %vm1041
        %v1043 = vsel %vm1042, %v1034, %v1039
        %v1044 = vrsqrt.pop %v805
        %v1045 = vmul.f32 %v1044, %v805
        %v1046 = vmul.f32 %v1045, %v1044
        %v1047 = vmul.f32 0.5, %v1046
        %v1048 = vsub.f32 1.5, %v1047
        %v1049 = vmul.f32 %v1044, %v1048
        %vm1050 = vweird.f32 %v805
        %vm1051 = vweird.f32 %v1044
        %vm1052 = vmor %vm1050, %vm1051
        %v1053 = vsel %vm1052, %v1044, %v1049
        %v1054 = vrsqrt.pop %v806
        %v1055 = vmul.f32 %v1054, %v806
        %v1056 = vmul.f32 %v1055, %v1054
        %v1057 = vmul.f32 0.5, %v1056
        %v1058 = vsub.f32 1.5, %v1057
        %v1059 = vmul.f32 %v1054, %v1058
        %vm1060 = vweird.f32 %v806
        %vm1061 = vweird.f32 %v1054
        %vm1062 = vmor %vm1060, %vm1061
        %v1063 = vsel %vm1062, %v1054, %v1059
        %v1064 = vrsqrt.pop %v807
        %v1065 = vmul.f32 %v1064, %v807
        %v1066 = vmul.f32 %v1065, %v1064
        %v1067 = vmul.f32 0.5, %v1066
        %v1068 = vsub.f32 1.5, %v1067
        %v1069 = vmul.f32 %v1064, %v1068
        %vm1070 = vweird.f32 %v807
        %vm1071 = vweird.f32 %v1064
        %vm1072 = vmor %vm1070, %vm1071
        %v1073 = vsel %vm1072, %v1064, %v1069
        %v1074 = vrsqrt.pop %v808
        %v1075 = vmul.f32 %v1074, %v808
        %v1076 = vmul.f32 %v1075, %v1074
        %v1077 = vmul.f32 0.5, %v1076
        %v1078 = vsub.f32 1.5, %v1077
        %v1079 = vmul.f32 %v1074, %v1078
        %vm1080 = vweird.f32 %v808
        %vm1081 = vweird.f32 %v1074
        %vm1082 = vmor %vm1080, %vm1081
        %v1083 = vsel %vm1082, %v1074, %v1079
        %v1084 = vrsqrt.pop %v809
        %v1085 = vmul.f32 %v1084, %v809
        %v1086 = vmul.f32 %v1085, %v1084
        %v1087 = vmul.f32 0.5, %v1086
        %v1088 = vsub.f32 1.5, %v1087
        %v1089 = vmul.f32 %v1084, %v1088
        %vm1090 = vweird.f32 %v809
        %vm1091 = vweird.f32 %v1084
        %vm1092 = vmor %vm1090, %vm1091
        %v1093 = vsel %vm1092, %v1084, %v1089
        %v1094 = vrsqrt.pop %v810
        %v1095 = vmul.f32 %v1094, %v810
        %v1096 = vmul.f32 %v1095, %v1094
        %v1097 = vmul.f32 0.5, %v1096
        %v1098 = vsub.f32 1.5, %v1097
        %v1099 = vmul.f32 %v1094, %v1098
        %vm1100 = vweird.f32 %v810
        %vm1101 = vweird.f32 %v1094
        %vm1102 = vmor %vm1100, %vm1101
        %v1103 = vsel %vm1102, %v1094, %v1099
        %v1104 = vrsqrt.pop %v811
        %v1105 = vmul.f32 %v1104, %v811
        %v1106 = vmul.f32 %v1105, %v1104
        %v1107 = vmul.f32 0.5, %v1106
        %v1108 = vsub.f32 1.5, %v1107
        %v1109 = vmul.f32 %v1104, %v1108
        %vm1110 = vweird.f32 %v811
        %vm1111 = vweird.f32 %v1104
        %vm1112 = vmor %vm1110, %vm1111
        %v1113 = vsel %vm1112, %v1104, %v1109
        %v1114 = vrsqrt.pop %v812
        %v1115 = vmul.f32 %v1114, %v812
        %v1116 = vmul.f32 %v1115, %v1114
        %v1117 = vmul.f32 0.5, %v1116
        %v1118 = vsub.f32 1.5, %v1117
        %v1119 = vmul.f32 %v1114, %v1118
        %vm1120 = vweird.f32 %v812
        %vm1121 = vweird.f32 %v1114
        %vm1122 = vmor %vm1120, %vm1121
        %v1123 = vsel %vm1122, %v1114, %v1119
        %v1124 = vrsqrt.pop %v813
        %v1125 = vmul.f32 %v1124, %v813
        %v1126 = vmul.f32 %v1125, %v1124
        %v1127 = vmul.f32 0.5, %v1126
        %v1128 = vsub.f32 1.5, %v1127
        %v1129 = vmul.f32 %v1124, %v1128
        %vm1130 = vweird.f32 %v813
        %vm1131 = vweird.f32 %v1124
        %vm1132 = vmor %vm1130, %vm1131
        %v1133 = vsel %vm1132, %v1124, %v1129
        %v1134 = vmul.f32 %v622, %v823
        %v1135 = vmul.f32 %v623, %v833
        %v1136 = vmul.f32 %v624, %v843
        %v1137 = vmul.f32 %v625, %v853
        %v1138 = vmul.f32 %v626, %v863
        %v1139 = vmul.f32 %v627, %v873
        %v1140 = vmul.f32 %v628, %v883
        %v1141 = vmul.f32 %v629, %v893
        %v1142 = vmul.f32 %v630, %v903
        %v1143 = vmul.f32 %v631, %v913
        %v1144 = vmul.f32 %v632, %v923
        %v1145 = vmul.f32 %v633, %v933
        %v1146 = vmul.f32 %v634, %v943
        %v1147 = vmul.f32 %v635, %v953
        %v1148 = vmul.f32 %v636, %v963
        %v1149 = vmul.f32 %v637, %v973
        %v1150 = vmul.f32 %v638, %v983
        %v1151 = vmul.f32 %v639, %v993
        %v1152 = vmul.f32 %v640, %v1003
        %v1153 = vmul.f32 %v641, %v1013
        %v1154 = vmul.f32 %v642, %v1023
        %v1155 = vmul.f32 %v643, %v1033
        %v1156 = vmul.f32 %v644, %v1043
        %v1157 = vmul.f32 %v645, %v1053
        %v1158 = vmul.f32 %v646, %v1063
        %v1159 = vmul.f32 %v647, %v1073
        %v1160 = vmul.f32 %v648, %v1083
        %v1161 = vmul.f32 %v649, %v1093
        %v1162 = vmul.f32 %v650, %v1103
        %v1163 = vmul.f32 %v651, %v1113
        %v1164 = vmul.f32 %v652, %v1123
        %v1165 = vmul.f32 %v653, %v1133
        %v1166 = vld [vmem:[%s2] sm:$0x1]
        %v1168 = vperm.slane %v1166, 0
        %v1170 = vmul.f32 %v1134, %v1168
        %v1171 = vmul.f32 %v1135, %v1168
        %v1172 = vmul.f32 %v1136, %v1168
        %v1173 = vmul.f32 %v1137, %v1168
        %v1174 = vmul.f32 %v1138, %v1168
        %v1175 = vmul.f32 %v1139, %v1168
        %v1176 = vmul.f32 %v1140, %v1168
        %v1177 = vmul.f32 %v1141, %v1168
        %v1178 = vmul.f32 %v1142, %v1168
        %v1179 = vmul.f32 %v1143, %v1168
        %v1180 = vmul.f32 %v1144, %v1168
        %v1181 = vmul.f32 %v1145, %v1168
        %v1182 = vmul.f32 %v1146, %v1168
        %v1183 = vmul.f32 %v1147, %v1168
        %v1184 = vmul.f32 %v1148, %v1168
        %v1185 = vmul.f32 %v1149, %v1168
        %v1186 = vmul.f32 %v1150, %v1168
        %v1187 = vmul.f32 %v1151, %v1168
        %v1188 = vmul.f32 %v1152, %v1168
        %v1189 = vmul.f32 %v1153, %v1168
        %v1190 = vmul.f32 %v1154, %v1168
        %v1191 = vmul.f32 %v1155, %v1168
        %v1192 = vmul.f32 %v1156, %v1168
        %v1193 = vmul.f32 %v1157, %v1168
        %v1194 = vmul.f32 %v1158, %v1168
        %v1195 = vmul.f32 %v1159, %v1168
        %v1196 = vmul.f32 %v1160, %v1168
        %v1197 = vmul.f32 %v1161, %v1168
        %v1198 = vmul.f32 %v1162, %v1168
        %v1199 = vmul.f32 %v1163, %v1168
        %v1200 = vmul.f32 %v1164, %v1168
        %v1201 = vmul.f32 %v1165, %v1168
        %v1202 = vld [vmem:[#allocation7] sm:$0x1]
        %v1204 = vperm.slane %v1202, 0
        %v1206 = vadd.f32 %v1170, %v1204
        %v1207 = vadd.f32 %v1171, %v1204
        %v1208 = vadd.f32 %v1172, %v1204
        %v1209 = vadd.f32 %v1173, %v1204
        %v1210 = vadd.f32 %v1174, %v1204
        %v1211 = vadd.f32 %v1175, %v1204
        %v1212 = vadd.f32 %v1176, %v1204
        %v1213 = vadd.f32 %v1177, %v1204
        %v1214 = vadd.f32 %v1178, %v1204
        %v1215 = vadd.f32 %v1179, %v1204
        %v1216 = vadd.f32 %v1180, %v1204
        %v1217 = vadd.f32 %v1181, %v1204
        %v1218 = vadd.f32 %v1182, %v1204
        %v1219 = vadd.f32 %v1183, %v1204
        %v1220 = vadd.f32 %v1184, %v1204
        %v1221 = vadd.f32 %v1185, %v1204
        %v1222 = vadd.f32 %v1186, %v1204
        %v1223 = vadd.f32 %v1187, %v1204
        %v1224 = vadd.f32 %v1188, %v1204
        %v1225 = vadd.f32 %v1189, %v1204
        %v1226 = vadd.f32 %v1190, %v1204
        %v1227 = vadd.f32 %v1191, %v1204
        %v1228 = vadd.f32 %v1192, %v1204
        %v1229 = vadd.f32 %v1193, %v1204
        %v1230 = vadd.f32 %v1194, %v1204
        %v1231 = vadd.f32 %v1195, %v1204
        %v1232 = vadd.f32 %v1196, %v1204
        %v1233 = vadd.f32 %v1197, %v1204
        %v1234 = vadd.f32 %v1198, %v1204
        %v1235 = vadd.f32 %v1199, %v1204
        %v1236 = vadd.f32 %v1200, %v1204
        %v1237 = vadd.f32 %v1201, %v1204
        %v1238 = vsub.f32 0.0, %v1206
        %v1239 = vsub.f32 0.0, %v1207
        %v1240 = vsub.f32 0.0, %v1208
        %v1241 = vsub.f32 0.0, %v1209
        %v1242 = vsub.f32 0.0, %v1210
        %v1243 = vsub.f32 0.0, %v1211
        %v1244 = vsub.f32 0.0, %v1212
        %v1245 = vsub.f32 0.0, %v1213
        %v1246 = vsub.f32 0.0, %v1214
        %v1247 = vsub.f32 0.0, %v1215
        %v1248 = vsub.f32 0.0, %v1216
        %v1249 = vsub.f32 0.0, %v1217
        %v1250 = vsub.f32 0.0, %v1218
        %v1251 = vsub.f32 0.0, %v1219
        %v1252 = vsub.f32 0.0, %v1220
        %v1253 = vsub.f32 0.0, %v1221
        %v1254 = vsub.f32 0.0, %v1222
        %v1255 = vsub.f32 0.0, %v1223
        %v1256 = vsub.f32 0.0, %v1224
        %v1257 = vsub.f32 0.0, %v1225
        %v1258 = vsub.f32 0.0, %v1226
        %v1259 = vsub.f32 0.0, %v1227
        %v1260 = vsub.f32 0.0, %v1228
        %v1261 = vsub.f32 0.0, %v1229
        %v1262 = vsub.f32 0.0, %v1230
        %v1263 = vsub.f32 0.0, %v1231
        %v1264 = vsub.f32 0.0, %v1232
        %v1265 = vsub.f32 0.0, %v1233
        %v1266 = vsub.f32 0.0, %v1234
        %v1267 = vsub.f32 0.0, %v1235
        %v1268 = vsub.f32 0.0, %v1236
        %v1269 = vsub.f32 0.0, %v1237
        %v1270 = vmul.f32 %v1238, 1.442695
        %v1271 = vpow.pop %v1270
        %v1272 = vmul.f32 %v1239, 1.442695
        %v1273 = vpow.pop %v1272
        %v1274 = vmul.f32 %v1240, 1.442695
        %v1275 = vpow.pop %v1274
        %v1276 = vmul.f32 %v1241, 1.442695
        %v1277 = vpow.pop %v1276
        %v1278 = vmul.f32 %v1242, 1.442695
        %v1279 = vpow.pop %v1278
        %v1280 = vmul.f32 %v1243, 1.442695
        %v1281 = vpow.pop %v1280
        %v1282 = vmul.f32 %v1244, 1.442695
        %v1283 = vpow.pop %v1282
        %v1284 = vmul.f32 %v1245, 1.442695
        %v1285 = vpow.pop %v1284
        %v1286 = vmul.f32 %v1246, 1.442695
        %v1287 = vpow.pop %v1286
        %v1288 = vmul.f32 %v1247, 1.442695
        %v1289 = vpow.pop %v1288
        %v1290 = vmul.f32 %v1248, 1.442695
        %v1291 = vpow.pop %v1290
        %v1292 = vmul.f32 %v1249, 1.442695
        %v1293 = vpow.pop %v1292
        %v1294 = vmul.f32 %v1250, 1.442695
        %v1295 = vpow.pop %v1294
        %v1296 = vmul.f32 %v1251, 1.442695
        %v1297 = vpow.pop %v1296
        %v1298 = vmul.f32 %v1252, 1.442695
        %v1299 = vpow.pop %v1298
        %v1300 = vmul.f32 %v1253, 1.442695
        %v1301 = vpow.pop %v1300
        %v1302 = vmul.f32 %v1254, 1.442695
        %v1303 = vpow.pop %v1302
        %v1304 = vmul.f32 %v1255, 1.442695
        %v1305 = vpow.pop %v1304
        %v1306 = vmul.f32 %v1256, 1.442695
        %v1307 = vpow.pop %v1306
        %v1308 = vmul.f32 %v1257, 1.442695
        %v1309 = vpow.pop %v1308
        %v1310 = vmul.f32 %v1258, 1.442695
        %v1311 = vpow.pop %v1310
        %v1312 = vmul.f32 %v1259, 1.442695
        %v1313 = vpow.pop %v1312
        %v1314 = vmul.f32 %v1260, 1.442695
        %v1315 = vpow.pop %v1314
        %v1316 = vmul.f32 %v1261, 1.442695
        %v1317 = vpow.pop %v1316
        %v1318 = vmul.f32 %v1262, 1.442695
        %v1319 = vpow.pop %v1318
        %v1320 = vmul.f32 %v1263, 1.442695
        %v1321 = vpow.pop %v1320
        %v1322 = vmul.f32 %v1264, 1.442695
        %v1323 = vpow.pop %v1322
        %v1324 = vmul.f32 %v1265, 1.442695
        %v1325 = vpow.pop %v1324
        %v1326 = vmul.f32 %v1266, 1.442695
        %v1327 = vpow.pop %v1326
        %v1328 = vmul.f32 %v1267, 1.442695
        %v1329 = vpow.pop %v1328
        %v1330 = vmul.f32 %v1268, 1.442695
        %v1331 = vpow.pop %v1330
        %v1332 = vmul.f32 %v1269, 1.442695
        %v1333 = vpow.pop %v1332
        %v1334 = vadd.f32 %v1271, 1.0
        %v1335 = vadd.f32 %v1273, 1.0
        %v1336 = vadd.f32 %v1275, 1.0
        %v1337 = vadd.f32 %v1277, 1.0
        %v1338 = vadd.f32 %v1279, 1.0
        %v1339 = vadd.f32 %v1281, 1.0
        %v1340 = vadd.f32 %v1283, 1.0
        %v1341 = vadd.f32 %v1285, 1.0
        %v1342 = vadd.f32 %v1287, 1.0
        %v1343 = vadd.f32 %v1289, 1.0
        %v1344 = vadd.f32 %v1291, 1.0
        %v1345 = vadd.f32 %v1293, 1.0
        %v1346 = vadd.f32 %v1295, 1.0
        %v1347 = vadd.f32 %v1297, 1.0
        %v1348 = vadd.f32 %v1299, 1.0
        %v1349 = vadd.f32 %v1301, 1.0
        %v1350 = vadd.f32 %v1303, 1.0
        %v1351 = vadd.f32 %v1305, 1.0
        %v1352 = vadd.f32 %v1307, 1.0
        %v1353 = vadd.f32 %v1309, 1.0
        %v1354 = vadd.f32 %v1311, 1.0
        %v1355 = vadd.f32 %v1313, 1.0
        %v1356 = vadd.f32 %v1315, 1.0
        %v1357 = vadd.f32 %v1317, 1.0
        %v1358 = vadd.f32 %v1319, 1.0
        %v1359 = vadd.f32 %v1321, 1.0
        %v1360 = vadd.f32 %v1323, 1.0
        %v1361 = vadd.f32 %v1325, 1.0
        %v1362 = vadd.f32 %v1327, 1.0
        %v1363 = vadd.f32 %v1329, 1.0
        %v1364 = vadd.f32 %v1331, 1.0
        %v1365 = vadd.f32 %v1333, 1.0
        %v1366 = vrcp.pop %v1334
        %v1367 = vrcp.pop %v1335
        %v1368 = vrcp.pop %v1336
        %v1369 = vrcp.pop %v1337
        %v1370 = vrcp.pop %v1338
        %v1371 = vrcp.pop %v1339
        %v1372 = vrcp.pop %v1340
        %v1373 = vrcp.pop %v1341
        %v1374 = vrcp.pop %v1342
        %v1375 = vrcp.pop %v1343
        %v1376 = vrcp.pop %v1344
        %v1377 = vrcp.pop %v1345
        %v1378 = vrcp.pop %v1346
        %v1379 = vrcp.pop %v1347
        %v1380 = vrcp.pop %v1348
        %v1381 = vrcp.pop %v1349
        %v1382 = vrcp.pop %v1350
        %v1383 = vrcp.pop %v1351
        %v1384 = vrcp.pop %v1352
        %v1385 = vrcp.pop %v1353
        %v1386 = vrcp.pop %v1354
        %v1387 = vrcp.pop %v1355
        %v1388 = vrcp.pop %v1356
        %v1389 = vrcp.pop %v1357
        %v1390 = vrcp.pop %v1358
        %v1391 = vrcp.pop %v1359
        %v1392 = vrcp.pop %v1360
        %v1393 = vrcp.pop %v1361
        %v1394 = vrcp.pop %v1362
        %v1395 = vrcp.pop %v1363
        %v1396 = vrcp.pop %v1364
        %v1397 = vrcp.pop %v1365
        %v1398 = vmul.f32 %v1206, %v1366
        %v1399 = vmul.f32 %v1207, %v1367
        %v1400 = vmul.f32 %v1208, %v1368
        %v1401 = vmul.f32 %v1209, %v1369
        %v1402 = vmul.f32 %v1210, %v1370
        %v1403 = vmul.f32 %v1211, %v1371
        %v1404 = vmul.f32 %v1212, %v1372
        %v1405 = vmul.f32 %v1213, %v1373
        %v1406 = vmul.f32 %v1214, %v1374
        %v1407 = vmul.f32 %v1215, %v1375
        %v1408 = vmul.f32 %v1216, %v1376
        %v1409 = vmul.f32 %v1217, %v1377
        %v1410 = vmul.f32 %v1218, %v1378
        %v1411 = vmul.f32 %v1219, %v1379
        %v1412 = vmul.f32 %v1220, %v1380
        %v1413 = vmul.f32 %v1221, %v1381
        %v1414 = vmul.f32 %v1222, %v1382
        %v1415 = vmul.f32 %v1223, %v1383
        %v1416 = vmul.f32 %v1224, %v1384
        %v1417 = vmul.f32 %v1225, %v1385
        %v1418 = vmul.f32 %v1226, %v1386
        %v1419 = vmul.f32 %v1227, %v1387
        %v1420 = vmul.f32 %v1228, %v1388
        %v1421 = vmul.f32 %v1229, %v1389
        %v1422 = vmul.f32 %v1230, %v1390
        %v1423 = vmul.f32 %v1231, %v1391
        %v1424 = vmul.f32 %v1232, %v1392
        %v1425 = vmul.f32 %v1233, %v1393
        %v1426 = vmul.f32 %v1234, %v1394
        %v1427 = vmul.f32 %v1235, %v1395
        %v1428 = vmul.f32 %v1236, %v1396
        %v1429 = vmul.f32 %v1237, %v1397
        %v1430 = vld [vmem:[%s421] sm:$0xff]
        %v1431 = vld [vmem:[%s421 + $0x8] sm:$0xff]
        %v1432 = vld [vmem:[%s421 + $0x10] sm:$0xff]
        %v1433 = vld [vmem:[%s421 + $0x18] sm:$0xff]
        %v1434 = vld [vmem:[%s421 + $0x20] sm:$0xff]
        %v1435 = vld [vmem:[%s421 + $0x28] sm:$0xff]
        %v1436 = vld [vmem:[%s421 + $0x30] sm:$0xff]
        %v1437 = vld [vmem:[%s421 + $0x38] sm:$0xff]
        %v1438 = vld [vmem:[%s421 + $0x40] sm:$0xff]
        %v1439 = vld [vmem:[%s421 + $0x48] sm:$0xff]
        %v1440 = vld [vmem:[%s421 + $0x50] sm:$0xff]
        %v1441 = vld [vmem:[%s421 + $0x58] sm:$0xff]
        %v1442 = vld [vmem:[%s421 + $0x60] sm:$0xff]
        %v1443 = vld [vmem:[%s421 + $0x68] sm:$0xff]
        %v1444 = vld [vmem:[%s421 + $0x70] sm:$0xff]
        %v1445 = vld [vmem:[%s421 + $0x78] sm:$0xff]
        %v1446 = vld [vmem:[%s421 + $0x80] sm:$0xff]
        %v1447 = vld [vmem:[%s421 + $0x88] sm:$0xff]
        %v1448 = vld [vmem:[%s421 + $0x90] sm:$0xff]
        %v1449 = vld [vmem:[%s421 + $0x98] sm:$0xff]
        %v1450 = vld [vmem:[%s421 + $0xa0] sm:$0xff]
        %v1451 = vld [vmem:[%s421 + $0xa8] sm:$0xff]
        %v1452 = vld [vmem:[%s421 + $0xb0] sm:$0xff]
        %v1453 = vld [vmem:[%s421 + $0xb8] sm:$0xff]
        %v1454 = vld [vmem:[%s421 + $0xc0] sm:$0xff]
        %v1455 = vld [vmem:[%s421 + $0xc8] sm:$0xff]
        %v1456 = vld [vmem:[%s421 + $0xd0] sm:$0xff]
        %v1457 = vld [vmem:[%s421 + $0xd8] sm:$0xff]
        %v1458 = vld [vmem:[%s421 + $0xe0] sm:$0xff]
        %v1459 = vld [vmem:[%s421 + $0xe8] sm:$0xff]
        %v1460 = vld [vmem:[%s421 + $0xf0] sm:$0xff]
        %v1461 = vld [vmem:[%s421 + $0xf8] sm:$0xff]
        %v1462 = vld [vmem:[#allocation8] sm:$0xff]
        %v1463 = vld [vmem:[#allocation8 + $0x8] sm:$0xff]
        %v1464 = vld [vmem:[#allocation8 + $0x10] sm:$0xff]
        %v1465 = vld [vmem:[#allocation8 + $0x18] sm:$0xff]
        %v1466 = vld [vmem:[#allocation8 + $0x20] sm:$0xff]
        %v1467 = vld [vmem:[#allocation8 + $0x28] sm:$0xff]
        %v1468 = vld [vmem:[#allocation8 + $0x30] sm:$0xff]
        %v1469 = vld [vmem:[#allocation8 + $0x38] sm:$0xff]
        %v1470 = vld [vmem:[#allocation8 + $0x40] sm:$0xff]
        %v1471 = vld [vmem:[#allocation8 + $0x48] sm:$0xff]
        %v1472 = vld [vmem:[#allocation8 + $0x50] sm:$0xff]
        %v1473 = vld [vmem:[#allocation8 + $0x58] sm:$0xff]
        %v1474 = vld [vmem:[#allocation8 + $0x60] sm:$0xff]
        %v1475 = vld [vmem:[#allocation8 + $0x68] sm:$0xff]
        %v1476 = vld [vmem:[#allocation8 + $0x70] sm:$0xff]
        %v1477 = vld [vmem:[#allocation8 + $0x78] sm:$0xff]
        %v1478 = vld [vmem:[#allocation8 + $0x80] sm:$0xff]
        %v1479 = vld [vmem:[#allocation8 + $0x88] sm:$0xff]
        %v1480 = vld [vmem:[#allocation8 + $0x90] sm:$0xff]
        %v1481 = vld [vmem:[#allocation8 + $0x98] sm:$0xff]
        %v1482 = vld [vmem:[#allocation8 + $0xa0] sm:$0xff]
        %v1483 = vld [vmem:[#allocation8 + $0xa8] sm:$0xff]
        %v1484 = vld [vmem:[#allocation8 + $0xb0] sm:$0xff]
        %v1485 = vld [vmem:[#allocation8 + $0xb8] sm:$0xff]
        %v1486 = vld [vmem:[#allocation8 + $0xc0] sm:$0xff]
        %v1487 = vld [vmem:[#allocation8 + $0xc8] sm:$0xff]
        %v1488 = vld [vmem:[#allocation8 + $0xd0] sm:$0xff]
        %v1489 = vld [vmem:[#allocation8 + $0xd8] sm:$0xff]
        %v1490 = vld [vmem:[#allocation8 + $0xe0] sm:$0xff]
        %v1491 = vld [vmem:[#allocation8 + $0xe8] sm:$0xff]
        %v1492 = vld [vmem:[#allocation8 + $0xf0] sm:$0xff]
        %v1493 = vld [vmem:[#allocation8 + $0xf8] sm:$0xff]
        %v1494 = vld [vmem:[%s5] sm:$0x1]
        %v1496 = vperm.slane %v1494, 0
        %1498 = vmatpush.msra.mxu0 %v1477
        %1499 = vmatpush.msra.mxu0 %v1476
        %1500 = vmatpush.msra.mxu0 %v1475
        %1501 = vmatpush.msra.mxu0 %v1474
        %1502 = vmatpush.msra.mxu0 %v1473
        %1503 = vmatpush.msra.mxu0 %v1472
        %1504 = vmatpush.msra.mxu0 %v1471
        %1505 = vmatpush.msra.mxu0 %v1470
        %1506 = vmatpush.msra.mxu0 %v1469
        %1507 = vmatpush.msra.mxu0 %v1468
        %1508 = vmatpush.msra.mxu0 %v1467
        %1509 = vmatpush.msra.mxu0 %v1466
        %1510 = vmatpush.msra.mxu0 %v1465
        %1511 = vmatpush.msra.mxu0 %v1464
        %1512 = vmatpush.msra.mxu0 %v1463
        %1513 = vmatpush.msra.mxu0 %v1462
        %1514 = vmatmul.f32.gmra.mxu0 %v1398
        %v1515 = vpop.f32.mrf.mxu0
        %v1516 = vadd.f32 %v1496, %v1515
        %1517 = vmatmul.f32.gmra.mxu0 %v1399
        %v1518 = vpop.f32.mrf.mxu0
        %v1519 = vadd.f32 %v1496, %v1518
        %1520 = vmatmul.f32.gmra.mxu0 %v1400
        %v1521 = vpop.f32.mrf.mxu0
        %v1522 = vadd.f32 %v1496, %v1521
        %1523 = vmatmul.f32.gmra.mxu0 %v1401
        %v1524 = vpop.f32.mrf.mxu0
        %v1525 = vadd.f32 %v1496, %v1524
        %1526 = vmatmul.f32.gmra.mxu0 %v1402
        %v1527 = vpop.f32.mrf.mxu0
        %v1528 = vadd.f32 %v1496, %v1527
        %1529 = vmatmul.f32.gmra.mxu0 %v1403
        %v1530 = vpop.f32.mrf.mxu0
        %v1531 = vadd.f32 %v1496, %v1530
        %1532 = vmatmul.f32.gmra.mxu0 %v1404
        %v1533 = vpop.f32.mrf.mxu0
        %v1534 = vadd.f32 %v1496, %v1533
        %1535 = vmatmul.f32.gmra.mxu0 %v1405
        %v1536 = vpop.f32.mrf.mxu0
        %v1537 = vadd.f32 %v1496, %v1536
        %1538 = vmatmul.f32.gmra.mxu0 %v1406
        %v1539 = vpop.f32.mrf.mxu0
        %v1540 = vadd.f32 %v1496, %v1539
        %1541 = vmatmul.f32.gmra.mxu0 %v1407
        %v1542 = vpop.f32.mrf.mxu0
        %v1543 = vadd.f32 %v1496, %v1542
        %1544 = vmatmul.f32.gmra.mxu0 %v1408
        %v1545 = vpop.f32.mrf.mxu0
        %v1546 = vadd.f32 %v1496, %v1545
        %1547 = vmatmul.f32.gmra.mxu0 %v1409
        %v1548 = vpop.f32.mrf.mxu0
        %v1549 = vadd.f32 %v1496, %v1548
        %1550 = vmatmul.f32.gmra.mxu0 %v1410
        %v1551 = vpop.f32.mrf.mxu0
        %v1552 = vadd.f32 %v1496, %v1551
        %1553 = vmatmul.f32.gmra.mxu0 %v1411
        %v1554 = vpop.f32.mrf.mxu0
        %v1555 = vadd.f32 %v1496, %v1554
        %1556 = vmatmul.f32.gmra.mxu0 %v1412
        %v1557 = vpop.f32.mrf.mxu0
        %v1558 = vadd.f32 %v1496, %v1557
        %1559 = vmatmul.f32.gmra.mxu0 %v1413
        %v1560 = vpop.f32.mrf.mxu0
        %v1561 = vadd.f32 %v1496, %v1560
        %1562 = vmatmul.f32.gmra.mxu0 %v1414
        %v1563 = vpop.f32.mrf.mxu0
        %v1564 = vadd.f32 %v1496, %v1563
        %1565 = vmatmul.f32.gmra.mxu0 %v1415
        %v1566 = vpop.f32.mrf.mxu0
        %v1567 = vadd.f32 %v1496, %v1566
        %1568 = vmatmul.f32.gmra.mxu0 %v1416
        %v1569 = vpop.f32.mrf.mxu0
        %v1570 = vadd.f32 %v1496, %v1569
        %1571 = vmatmul.f32.gmra.mxu0 %v1417
        %v1572 = vpop.f32.mrf.mxu0
        %v1573 = vadd.f32 %v1496, %v1572
        %1574 = vmatmul.f32.gmra.mxu0 %v1418
        %v1575 = vpop.f32.mrf.mxu0
        %v1576 = vadd.f32 %v1496, %v1575
        %1577 = vmatmul.f32.gmra.mxu0 %v1419
        %v1578 = vpop.f32.mrf.mxu0
        %v1579 = vadd.f32 %v1496, %v1578
        %1580 = vmatmul.f32.gmra.mxu0 %v1420
        %v1581 = vpop.f32.mrf.mxu0
        %v1582 = vadd.f32 %v1496, %v1581
        %1583 = vmatmul.f32.gmra.mxu0 %v1421
        %v1584 = vpop.f32.mrf.mxu0
        %v1585 = vadd.f32 %v1496, %v1584
        %1586 = vmatmul.f32.gmra.mxu0 %v1422
        %v1587 = vpop.f32.mrf.mxu0
        %v1588 = vadd.f32 %v1496, %v1587
        %1589 = vmatmul.f32.gmra.mxu0 %v1423
        %v1590 = vpop.f32.mrf.mxu0
        %v1591 = vadd.f32 %v1496, %v1590
        %1592 = vmatmul.f32.gmra.mxu0 %v1424
        %v1593 = vpop.f32.mrf.mxu0
        %v1594 = vadd.f32 %v1496, %v1593
        %1595 = vmatmul.f32.gmra.mxu0 %v1425
        %v1596 = vpop.f32.mrf.mxu0
        %v1597 = vadd.f32 %v1496, %v1596
        %1598 = vmatmul.f32.gmra.mxu0 %v1426
        %v1599 = vpop.f32.mrf.mxu0
        %v1600 = vadd.f32 %v1496, %v1599
        %1601 = vmatmul.f32.gmra.mxu0 %v1427
        %v1602 = vpop.f32.mrf.mxu0
        %v1603 = vadd.f32 %v1496, %v1602
        %1604 = vmatmul.f32.gmra.mxu0 %v1428
        %v1605 = vpop.f32.mrf.mxu0
        %v1606 = vadd.f32 %v1496, %v1605
        %1607 = vmatmul.f32.gmra.mxu0 %v1429
        %v1608 = vpop.f32.mrf.mxu0
        %v1609 = vadd.f32 %v1496, %v1608
        %1610 = vdwg.mxu0
        %1611 = vmatpush.msra.mxu0 %v1493
        %1612 = vmatpush.msra.mxu0 %v1492
        %1613 = vmatpush.msra.mxu0 %v1491
        %1614 = vmatpush.msra.mxu0 %v1490
        %1615 = vmatpush.msra.mxu0 %v1489
        %1616 = vmatpush.msra.mxu0 %v1488
        %1617 = vmatpush.msra.mxu0 %v1487
        %1618 = vmatpush.msra.mxu0 %v1486
        %1619 = vmatpush.msra.mxu0 %v1485
        %1620 = vmatpush.msra.mxu0 %v1484
        %1621 = vmatpush.msra.mxu0 %v1483
        %1622 = vmatpush.msra.mxu0 %v1482
        %1623 = vmatpush.msra.mxu0 %v1481
        %1624 = vmatpush.msra.mxu0 %v1480
        %1625 = vmatpush.msra.mxu0 %v1479
        %1626 = vmatpush.msra.mxu0 %v1478
        %1627 = vmatmul.f32.gmra.mxu0 %v1430
        %v1628 = vpop.f32.mrf.mxu0
        %v1629 = vadd.f32 %v1516, %v1628
        %1630 = vmatmul.f32.gmra.mxu0 %v1431
        %v1631 = vpop.f32.mrf.mxu0
        %v1632 = vadd.f32 %v1519, %v1631
        %1633 = vmatmul.f32.gmra.mxu0 %v1432
        %v1634 = vpop.f32.mrf.mxu0
        %v1635 = vadd.f32 %v1522, %v1634
        %1636 = vmatmul.f32.gmra.mxu0 %v1433
        %v1637 = vpop.f32.mrf.mxu0
        %v1638 = vadd.f32 %v1525, %v1637
        %1639 = vmatmul.f32.gmra.mxu0 %v1434
        %v1640 = vpop.f32.mrf.mxu0
        %v1641 = vadd.f32 %v1528, %v1640
        %1642 = vmatmul.f32.gmra.mxu0 %v1435
        %v1643 = vpop.f32.mrf.mxu0
        %v1644 = vadd.f32 %v1531, %v1643
        %1645 = vmatmul.f32.gmra.mxu0 %v1436
        %v1646 = vpop.f32.mrf.mxu0
        %v1647 = vadd.f32 %v1534, %v1646
        %1648 = vmatmul.f32.gmra.mxu0 %v1437
        %v1649 = vpop.f32.mrf.mxu0
        %v1650 = vadd.f32 %v1537, %v1649
        %1651 = vmatmul.f32.gmra.mxu0 %v1438
        %v1652 = vpop.f32.mrf.mxu0
        %v1653 = vadd.f32 %v1540, %v1652
        %1654 = vmatmul.f32.gmra.mxu0 %v1439
        %v1655 = vpop.f32.mrf.mxu0
        %v1656 = vadd.f32 %v1543, %v1655
        %1657 = vmatmul.f32.gmra.mxu0 %v1440
        %v1658 = vpop.f32.mrf.mxu0
        %v1659 = vadd.f32 %v1546, %v1658
        %1660 = vmatmul.f32.gmra.mxu0 %v1441
        %v1661 = vpop.f32.mrf.mxu0
        %v1662 = vadd.f32 %v1549, %v1661
        %1663 = vmatmul.f32.gmra.mxu0 %v1442
        %v1664 = vpop.f32.mrf.mxu0
        %v1665 = vadd.f32 %v1552, %v1664
        %1666 = vmatmul.f32.gmra.mxu0 %v1443
        %v1667 = vpop.f32.mrf.mxu0
        %v1668 = vadd.f32 %v1555, %v1667
        %1669 = vmatmul.f32.gmra.mxu0 %v1444
        %v1670 = vpop.f32.mrf.mxu0
        %v1671 = vadd.f32 %v1558, %v1670
        %1672 = vmatmul.f32.gmra.mxu0 %v1445
        %v1673 = vpop.f32.mrf.mxu0
        %v1674 = vadd.f32 %v1561, %v1673
        %1675 = vmatmul.f32.gmra.mxu0 %v1446
        %v1676 = vpop.f32.mrf.mxu0
        %v1677 = vadd.f32 %v1564, %v1676
        %1678 = vmatmul.f32.gmra.mxu0 %v1447
        %v1679 = vpop.f32.mrf.mxu0
        %v1680 = vadd.f32 %v1567, %v1679
        %1681 = vmatmul.f32.gmra.mxu0 %v1448
        %v1682 = vpop.f32.mrf.mxu0
        %v1683 = vadd.f32 %v1570, %v1682
        %1684 = vmatmul.f32.gmra.mxu0 %v1449
        %v1685 = vpop.f32.mrf.mxu0
        %v1686 = vadd.f32 %v1573, %v1685
        %1687 = vmatmul.f32.gmra.mxu0 %v1450
        %v1688 = vpop.f32.mrf.mxu0
        %v1689 = vadd.f32 %v1576, %v1688
        %1690 = vmatmul.f32.gmra.mxu0 %v1451
        %v1691 = vpop.f32.mrf.mxu0
        %v1692 = vadd.f32 %v1579, %v1691
        %1693 = vmatmul.f32.gmra.mxu0 %v1452
        %v1694 = vpop.f32.mrf.mxu0
        %v1695 = vadd.f32 %v1582, %v1694
        %1696 = vmatmul.f32.gmra.mxu0 %v1453
        %v1697 = vpop.f32.mrf.mxu0
        %v1698 = vadd.f32 %v1585, %v1697
        %1699 = vmatmul.f32.gmra.mxu0 %v1454
        %v1700 = vpop.f32.mrf.mxu0
        %v1701 = vadd.f32 %v1588, %v1700
        %1702 = vmatmul.f32.gmra.mxu0 %v1455
        %v1703 = vpop.f32.mrf.mxu0
        %v1704 = vadd.f32 %v1591, %v1703
        %1705 = vmatmul.f32.gmra.mxu0 %v1456
        %v1706 = vpop.f32.mrf.mxu0
        %v1707 = vadd.f32 %v1594, %v1706
        %1708 = vmatmul.f32.gmra.mxu0 %v1457
        %v1709 = vpop.f32.mrf.mxu0
        %v1710 = vadd.f32 %v1597, %v1709
        %1711 = vmatmul.f32.gmra.mxu0 %v1458
        %v1712 = vpop.f32.mrf.mxu0
        %v1713 = vadd.f32 %v1600, %v1712
        %1714 = vmatmul.f32.gmra.mxu0 %v1459
        %v1715 = vpop.f32.mrf.mxu0
        %v1716 = vadd.f32 %v1603, %v1715
        %1717 = vmatmul.f32.gmra.mxu0 %v1460
        %v1718 = vpop.f32.mrf.mxu0
        %v1719 = vadd.f32 %v1606, %v1718
        %1720 = vmatmul.f32.gmra.mxu0 %v1461
        %v1721 = vpop.f32.mrf.mxu0
        %v1722 = vadd.f32 %v1609, %v1721
        %1723 = vdwg.mxu0
        %1724 = vadd.xlane.f32.xlu0 %v1629
        %v1725 = vpop.xlane.xlu0 %1724
        %1726 = vadd.xlane.f32.xlu0 %v1632
        %v1727 = vpop.xlane.xlu0 %1726
        %1728 = vadd.xlane.f32.xlu0 %v1635
        %v1729 = vpop.xlane.xlu0 %1728
        %1730 = vadd.xlane.f32.xlu0 %v1638
        %v1731 = vpop.xlane.xlu0 %1730
        %1732 = vadd.xlane.f32.xlu0 %v1641
        %v1733 = vpop.xlane.xlu0 %1732
        %1734 = vadd.xlane.f32.xlu0 %v1644
        %v1735 = vpop.xlane.xlu0 %1734
        %1736 = vadd.xlane.f32.xlu0 %v1647
        %v1737 = vpop.xlane.xlu0 %1736
        %1738 = vadd.xlane.f32.xlu0 %v1650
        %v1739 = vpop.xlane.xlu0 %1738
        %1740 = vadd.xlane.f32.xlu0 %v1653
        %v1741 = vpop.xlane.xlu0 %1740
        %1742 = vadd.xlane.f32.xlu0 %v1656
        %v1743 = vpop.xlane.xlu0 %1742
        %1744 = vadd.xlane.f32.xlu0 %v1659
        %v1745 = vpop.xlane.xlu0 %1744
        %1746 = vadd.xlane.f32.xlu0 %v1662
        %v1747 = vpop.xlane.xlu0 %1746
        %1748 = vadd.xlane.f32.xlu0 %v1665
        %v1749 = vpop.xlane.xlu0 %1748
        %1750 = vadd.xlane.f32.xlu0 %v1668
        %v1751 = vpop.xlane.xlu0 %1750
        %1752 = vadd.xlane.f32.xlu0 %v1671
        %v1753 = vpop.xlane.xlu0 %1752
        %1754 = vadd.xlane.f32.xlu0 %v1674
        %v1755 = vpop.xlane.xlu0 %1754
        %1756 = vadd.xlane.f32.xlu0 %v1677
        %v1757 = vpop.xlane.xlu0 %1756
        %1758 = vadd.xlane.f32.xlu0 %v1680
        %v1759 = vpop.xlane.xlu0 %1758
        %1760 = vadd.xlane.f32.xlu0 %v1683
        %v1761 = vpop.xlane.xlu0 %1760
        %1762 = vadd.xlane.f32.xlu0 %v1686
        %v1763 = vpop.xlane.xlu0 %1762
        %1764 = vadd.xlane.f32.xlu0 %v1689
        %v1765 = vpop.xlane.xlu0 %1764
        %1766 = vadd.xlane.f32.xlu0 %v1692
        %v1767 = vpop.xlane.xlu0 %1766
        %1768 = vadd.xlane.f32.xlu0 %v1695
        %v1769 = vpop.xlane.xlu0 %1768
        %1770 = vadd.xlane.f32.xlu0 %v1698
        %v1771 = vpop.xlane.xlu0 %1770
        %1772 = vadd.xlane.f32.xlu0 %v1701
        %v1773 = vpop.xlane.xlu0 %1772
        %1774 = vadd.xlane.f32.xlu0 %v1704
        %v1775 = vpop.xlane.xlu0 %1774
        %1776 = vadd.xlane.f32.xlu0 %v1707
        %v1777 = vpop.xlane.xlu0 %1776
        %1778 = vadd.xlane.f32.xlu0 %v1710
        %v1779 = vpop.xlane.xlu0 %1778
        %1780 = vadd.xlane.f32.xlu0 %v1713
        %v1781 = vpop.xlane.xlu0 %1780
        %1782 = vadd.xlane.f32.xlu0 %v1716
        %v1783 = vpop.xlane.xlu0 %1782
        %1784 = vadd.xlane.f32.xlu0 %v1719
        %v1785 = vpop.xlane.xlu0 %1784
        %1786 = vadd.xlane.f32.xlu0 %v1722
        %v1787 = vpop.xlane.xlu0 %1786
        %v1788 = vmul.f32 %v1725, %v589
        %v1789 = vmul.f32 %v1727, %v589
        %v1790 = vmul.f32 %v1729, %v589
        %v1791 = vmul.f32 %v1731, %v589
        %v1792 = vmul.f32 %v1733, %v589
        %v1793 = vmul.f32 %v1735, %v589
        %v1794 = vmul.f32 %v1737, %v589
        %v1795 = vmul.f32 %v1739, %v589
        %v1796 = vmul.f32 %v1741, %v589
        %v1797 = vmul.f32 %v1743, %v589
        %v1798 = vmul.f32 %v1745, %v589
        %v1799 = vmul.f32 %v1747, %v589
        %v1800 = vmul.f32 %v1749, %v589
        %v1801 = vmul.f32 %v1751, %v589
        %v1802 = vmul.f32 %v1753, %v589
        %v1803 = vmul.f32 %v1755, %v589
        %v1804 = vmul.f32 %v1757, %v589
        %v1805 = vmul.f32 %v1759, %v589
        %v1806 = vmul.f32 %v1761, %v589
        %v1807 = vmul.f32 %v1763, %v589
        %v1808 = vmul.f32 %v1765, %v589
        %v1809 = vmul.f32 %v1767, %v589
        %v1810 = vmul.f32 %v1769, %v589
        %v1811 = vmul.f32 %v1771, %v589
        %v1812 = vmul.f32 %v1773, %v589
        %v1813 = vmul.f32 %v1775, %v589
        %v1814 = vmul.f32 %v1777, %v589
        %v1815 = vmul.f32 %v1779, %v589
        %v1816 = vmul.f32 %v1781, %v589
        %v1817 = vmul.f32 %v1783, %v589
        %v1818 = vmul.f32 %v1785, %v589
        %v1819 = vmul.f32 %v1787, %v589
        %v1820 = vsub.f32 %v1629, %v1788
        %v1821 = vsub.f32 %v1632, %v1789
        %v1822 = vsub.f32 %v1635, %v1790
        %v1823 = vsub.f32 %v1638, %v1791
        %v1824 = vsub.f32 %v1641, %v1792
        %v1825 = vsub.f32 %v1644, %v1793
        %v1826 = vsub.f32 %v1647, %v1794
        %v1827 = vsub.f32 %v1650, %v1795
        %v1828 = vsub.f32 %v1653, %v1796
        %v1829 = vsub.f32 %v1656, %v1797
        %v1830 = vsub.f32 %v1659, %v1798
        %v1831 = vsub.f32 %v1662, %v1799
        %v1832 = vsub.f32 %v1665, %v1800
        %v1833 = vsub.f32 %v1668, %v1801
        %v1834 = vsub.f32 %v1671, %v1802
        %v1835 = vsub.f32 %v1674, %v1803
        %v1836 = vsub.f32 %v1677, %v1804
        %v1837 = vsub.f32 %v1680, %v1805
        %v1838 = vsub.f32 %v1683, %v1806
        %v1839 = vsub.f32 %v1686, %v1807
        %v1840 = vsub.f32 %v1689, %v1808
        %v1841 = vsub.f32 %v1692, %v1809
        %v1842 = vsub.f32 %v1695, %v1810
        %v1843 = vsub.f32 %v1698, %v1811
        %v1844 = vsub.f32 %v1701, %v1812
        %v1845 = vsub.f32 %v1704, %v1813
        %v1846 = vsub.f32 %v1707, %v1814
        %v1847 = vsub.f32 %v1710, %v1815
        %v1848 = vsub.f32 %v1713, %v1816
        %v1849 = vsub.f32 %v1716, %v1817
        %v1850 = vsub.f32 %v1719, %v1818
        %v1851 = vsub.f32 %v1722, %v1819
        %v1852 = vmul.f32 %v1820, %v1820
        %v1853 = vmul.f32 %v1821, %v1821
        %v1854 = vmul.f32 %v1822, %v1822
        %v1855 = vmul.f32 %v1823, %v1823
        %v1856 = vmul.f32 %v1824, %v1824
        %v1857 = vmul.f32 %v1825, %v1825
        %v1858 = vmul.f32 %v1826, %v1826
        %v1859 = vmul.f32 %v1827, %v1827
        %v1860 = vmul.f32 %v1828, %v1828
        %v1861 = vmul.f32 %v1829, %v1829
        %v1862 = vmul.f32 %v1830, %v1830
        %v1863 = vmul.f32 %v1831, %v1831
        %v1864 = vmul.f32 %v1832, %v1832
        %v1865 = vmul.f32 %v1833, %v1833
        %v1866 = vmul.f32 %v1834, %v1834
        %v1867 = vmul.f32 %v1835, %v1835
        %v1868 = vmul.f32 %v1836, %v1836
        %v1869 = vmul.f32 %v1837, %v1837
        %v1870 = vmul.f32 %v1838, %v1838
        %v1871 = vmul.f32 %v1839, %v1839
        %v1872 = vmul.f32 %v1840, %v1840
        %v1873 = vmul.f32 %v1841, %v1841
        %v1874 = vmul.f32 %v1842, %v1842
        %v1875 = vmul.f32 %v1843, %v1843
        %v1876 = vmul.f32 %v1844, %v1844
        %v1877 = vmul.f32 %v1845, %v1845
        %v1878 = vmul.f32 %v1846, %v1846
        %v1879 = vmul.f32 %v1847, %v1847
        %v1880 = vmul.f32 %v1848, %v1848
        %v1881 = vmul.f32 %v1849, %v1849
        %v1882 = vmul.f32 %v1850, %v1850
        %v1883 = vmul.f32 %v1851, %v1851
        %1884 = vadd.xlane.f32.xlu0 %v1852
        %v1885 = vpop.xlane.xlu0 %1884
        %1886 = vadd.xlane.f32.xlu0 %v1853
        %v1887 = vpop.xlane.xlu0 %1886
        %1888 = vadd.xlane.f32.xlu0 %v1854
        %v1889 = vpop.xlane.xlu0 %1888
        %1890 = vadd.xlane.f32.xlu0 %v1855
        %v1891 = vpop.xlane.xlu0 %1890
        %1892 = vadd.xlane.f32.xlu0 %v1856
        %v1893 = vpop.xlane.xlu0 %1892
        %1894 = vadd.xlane.f32.xlu0 %v1857
        %v1895 = vpop.xlane.xlu0 %1894
        %1896 = vadd.xlane.f32.xlu0 %v1858
        %v1897 = vpop.xlane.xlu0 %1896
        %1898 = vadd.xlane.f32.xlu0 %v1859
        %v1899 = vpop.xlane.xlu0 %1898
        %1900 = vadd.xlane.f32.xlu0 %v1860
        %v1901 = vpop.xlane.xlu0 %1900
        %1902 = vadd.xlane.f32.xlu0 %v1861
        %v1903 = vpop.xlane.xlu0 %1902
        %1904 = vadd.xlane.f32.xlu0 %v1862
        %v1905 = vpop.xlane.xlu0 %1904
        %1906 = vadd.xlane.f32.xlu0 %v1863
        %v1907 = vpop.xlane.xlu0 %1906
        %1908 = vadd.xlane.f32.xlu0 %v1864
        %v1909 = vpop.xlane.xlu0 %1908
        %1910 = vadd.xlane.f32.xlu0 %v1865
        %v1911 = vpop.xlane.xlu0 %1910
        %1912 = vadd.xlane.f32.xlu0 %v1866
        %v1913 = vpop.xlane.xlu0 %1912
        %1914 = vadd.xlane.f32.xlu0 %v1867
        %v1915 = vpop.xlane.xlu0 %1914
        %1916 = vadd.xlane.f32.xlu0 %v1868
        %v1917 = vpop.xlane.xlu0 %1916
        %1918 = vadd.xlane.f32.xlu0 %v1869
        %v1919 = vpop.xlane.xlu0 %1918
        %1920 = vadd.xlane.f32.xlu0 %v1870
        %v1921 = vpop.xlane.xlu0 %1920
        %1922 = vadd.xlane.f32.xlu0 %v1871
        %v1923 = vpop.xlane.xlu0 %1922
        %1924 = vadd.xlane.f32.xlu0 %v1872
        %v1925 = vpop.xlane.xlu0 %1924
        %1926 = vadd.xlane.f32.xlu0 %v1873
        %v1927 = vpop.xlane.xlu0 %1926
        %1928 = vadd.xlane.f32.xlu0 %v1874
        %v1929 = vpop.xlane.xlu0 %1928
        %1930 = vadd.xlane.f32.xlu0 %v1875
        %v1931 = vpop.xlane.xlu0 %1930
        %1932 = vadd.xlane.f32.xlu0 %v1876
        %v1933 = vpop.xlane.xlu0 %1932
        %1934 = vadd.xlane.f32.xlu0 %v1877
        %v1935 = vpop.xlane.xlu0 %1934
        %1936 = vadd.xlane.f32.xlu0 %v1878
        %v1937 = vpop.xlane.xlu0 %1936
        %1938 = vadd.xlane.f32.xlu0 %v1879
        %v1939 = vpop.xlane.xlu0 %1938
        %1940 = vadd.xlane.f32.xlu0 %v1880
        %v1941 = vpop.xlane.xlu0 %1940
        %1942 = vadd.xlane.f32.xlu0 %v1881
        %v1943 = vpop.xlane.xlu0 %1942
        %1944 = vadd.xlane.f32.xlu0 %v1882
        %v1945 = vpop.xlane.xlu0 %1944
        %1946 = vadd.xlane.f32.xlu0 %v1883
        %v1947 = vpop.xlane.xlu0 %1946
        %v1948 = vmul.f32 %v1885, %v589
        %v1949 = vmul.f32 %v1887, %v589
        %v1950 = vmul.f32 %v1889, %v589
        %v1951 = vmul.f32 %v1891, %v589
        %v1952 = vmul.f32 %v1893, %v589
        %v1953 = vmul.f32 %v1895, %v589
        %v1954 = vmul.f32 %v1897, %v589
        %v1955 = vmul.f32 %v1899, %v589
        %v1956 = vmul.f32 %v1901, %v589
        %v1957 = vmul.f32 %v1903, %v589
        %v1958 = vmul.f32 %v1905, %v589
        %v1959 = vmul.f32 %v1907, %v589
        %v1960 = vmul.f32 %v1909, %v589
        %v1961 = vmul.f32 %v1911, %v589
        %v1962 = vmul.f32 %v1913, %v589
        %v1963 = vmul.f32 %v1915, %v589
        %v1964 = vmul.f32 %v1917, %v589
        %v1965 = vmul.f32 %v1919, %v589
        %v1966 = vmul.f32 %v1921, %v589
        %v1967 = vmul.f32 %v1923, %v589
        %v1968 = vmul.f32 %v1925, %v589
        %v1969 = vmul.f32 %v1927, %v589
        %v1970 = vmul.f32 %v1929, %v589
        %v1971 = vmul.f32 %v1931, %v589
        %v1972 = vmul.f32 %v1933, %v589
        %v1973 = vmul.f32 %v1935, %v589
        %v1974 = vmul.f32 %v1937, %v589
        %v1975 = vmul.f32 %v1939, %v589
        %v1976 = vmul.f32 %v1941, %v589
        %v1977 = vmul.f32 %v1943, %v589
        %v1978 = vmul.f32 %v1945, %v589
        %v1979 = vmul.f32 %v1947, %v589
        %v1980 = vadd.f32 %v1948, 1e-05
        %v1981 = vadd.f32 %v1949, 1e-05
        %v1982 = vadd.f32 %v1950, 1e-05
        %v1983 = vadd.f32 %v1951, 1e-05
        %v1984 = vadd.f32 %v1952, 1e-05
        %v1985 = vadd.f32 %v1953, 1e-05
        %v1986 = vadd.f32 %v1954, 1e-05
        %v1987 = vadd.f32 %v1955, 1e-05
        %v1988 = vadd.f32 %v1956, 1e-05
        %v1989 = vadd.f32 %v1957, 1e-05
        %v1990 = vadd.f32 %v1958, 1e-05
        %v1991 = vadd.f32 %v1959, 1e-05
        %v1992 = vadd.f32 %v1960, 1e-05
        %v1993 = vadd.f32 %v1961, 1e-05
        %v1994 = vadd.f32 %v1962, 1e-05
        %v1995 = vadd.f32 %v1963, 1e-05
        %v1996 = vadd.f32 %v1964, 1e-05
        %v1997 = vadd.f32 %v1965, 1e-05
        %v1998 = vadd.f32 %v1966, 1e-05
        %v1999 = vadd.f32 %v1967, 1e-05
        %v2000 = vadd.f32 %v1968, 1e-05
        %v2001 = vadd.f32 %v1969, 1e-05
        %v2002 = vadd.f32 %v1970, 1e-05
        %v2003 = vadd.f32 %v1971, 1e-05
        %v2004 = vadd.f32 %v1972, 1e-05
        %v2005 = vadd.f32 %v1973, 1e-05
        %v2006 = vadd.f32 %v1974, 1e-05
        %v2007 = vadd.f32 %v1975, 1e-05
        %v2008 = vadd.f32 %v1976, 1e-05
        %v2009 = vadd.f32 %v1977, 1e-05
        %v2010 = vadd.f32 %v1978, 1e-05
        %v2011 = vadd.f32 %v1979, 1e-05
        %v2012 = vrsqrt.pop %v1980
        %v2013 = vmul.f32 %v2012, %v1980
        %v2014 = vmul.f32 %v2013, %v2012
        %v2015 = vmul.f32 0.5, %v2014
        %v2016 = vsub.f32 1.5, %v2015
        %v2017 = vmul.f32 %v2012, %v2016
        %vm2018 = vweird.f32 %v1980
        %vm2019 = vweird.f32 %v2012
        %vm2020 = vmor %vm2018, %vm2019
        %v2021 = vsel %vm2020, %v2012, %v2017
        %v2022 = vrsqrt.pop %v1981
        %v2023 = vmul.f32 %v2022, %v1981
        %v2024 = vmul.f32 %v2023, %v2022
        %v2025 = vmul.f32 0.5, %v2024
        %v2026 = vsub.f32 1.5, %v2025
        %v2027 = vmul.f32 %v2022, %v2026
        %vm2028 = vweird.f32 %v1981
        %vm2029 = vweird.f32 %v2022
        %vm2030 = vmor %vm2028, %vm2029
        %v2031 = vsel %vm2030, %v2022, %v2027
        %v2032 = vrsqrt.pop %v1982
        %v2033 = vmul.f32 %v2032, %v1982
        %v2034 = vmul.f32 %v2033, %v2032
        %v2035 = vmul.f32 0.5, %v2034
        %v2036 = vsub.f32 1.5, %v2035
        %v2037 = vmul.f32 %v2032, %v2036
        %vm2038 = vweird.f32 %v1982
        %vm2039 = vweird.f32 %v2032
        %vm2040 = vmor %vm2038, %vm2039
        %v2041 = vsel %vm2040, %v2032, %v2037
        %v2042 = vrsqrt.pop %v1983
        %v2043 = vmul.f32 %v2042, %v1983
        %v2044 = vmul.f32 %v2043, %v2042
        %v2045 = vmul.f32 0.5, %v2044
        %v2046 = vsub.f32 1.5, %v2045
        %v2047 = vmul.f32 %v2042, %v2046
        %vm2048 = vweird.f32 %v1983
        %vm2049 = vweird.f32 %v2042
        %vm2050 = vmor %vm2048, %vm2049
        %v2051 = vsel %vm2050, %v2042, %v2047
        %v2052 = vrsqrt.pop %v1984
        %v2053 = vmul.f32 %v2052, %v1984
        %v2054 = vmul.f32 %v2053, %v2052
        %v2055 = vmul.f32 0.5, %v2054
        %v2056 = vsub.f32 1.5, %v2055
        %v2057 = vmul.f32 %v2052, %v2056
        %vm2058 = vweird.f32 %v1984
        %vm2059 = vweird.f32 %v2052
        %vm2060 = vmor %vm2058, %vm2059
        %v2061 = vsel %vm2060, %v2052, %v2057
        %v2062 = vrsqrt.pop %v1985
        %v2063 = vmul.f32 %v2062, %v1985
        %v2064 = vmul.f32 %v2063, %v2062
        %v2065 = vmul.f32 0.5, %v2064
        %v2066 = vsub.f32 1.5, %v2065
        %v2067 = vmul.f32 %v2062, %v2066
        %vm2068 = vweird.f32 %v1985
        %vm2069 = vweird.f32 %v2062
        %vm2070 = vmor %vm2068, %vm2069
        %v2071 = vsel %vm2070, %v2062, %v2067
        %v2072 = vrsqrt.pop %v1986
        %v2073 = vmul.f32 %v2072, %v1986
        %v2074 = vmul.f32 %v2073, %v2072
        %v2075 = vmul.f32 0.5, %v2074
        %v2076 = vsub.f32 1.5, %v2075
        %v2077 = vmul.f32 %v2072, %v2076
        %vm2078 = vweird.f32 %v1986
        %vm2079 = vweird.f32 %v2072
        %vm2080 = vmor %vm2078, %vm2079
        %v2081 = vsel %vm2080, %v2072, %v2077
        %v2082 = vrsqrt.pop %v1987
        %v2083 = vmul.f32 %v2082, %v1987
        %v2084 = vmul.f32 %v2083, %v2082
        %v2085 = vmul.f32 0.5, %v2084
        %v2086 = vsub.f32 1.5, %v2085
        %v2087 = vmul.f32 %v2082, %v2086
        %vm2088 = vweird.f32 %v1987
        %vm2089 = vweird.f32 %v2082
        %vm2090 = vmor %vm2088, %vm2089
        %v2091 = vsel %vm2090, %v2082, %v2087
        %v2092 = vrsqrt.pop %v1988
        %v2093 = vmul.f32 %v2092, %v1988
        %v2094 = vmul.f32 %v2093, %v2092
        %v2095 = vmul.f32 0.5, %v2094
        %v2096 = vsub.f32 1.5, %v2095
        %v2097 = vmul.f32 %v2092, %v2096
        %vm2098 = vweird.f32 %v1988
        %vm2099 = vweird.f32 %v2092
        %vm2100 = vmor %vm2098, %vm2099
        %v2101 = vsel %vm2100, %v2092, %v2097
        %v2102 = vrsqrt.pop %v1989
        %v2103 = vmul.f32 %v2102, %v1989
        %v2104 = vmul.f32 %v2103, %v2102
        %v2105 = vmul.f32 0.5, %v2104
        %v2106 = vsub.f32 1.5, %v2105
        %v2107 = vmul.f32 %v2102, %v2106
        %vm2108 = vweird.f32 %v1989
        %vm2109 = vweird.f32 %v2102
        %vm2110 = vmor %vm2108, %vm2109
        %v2111 = vsel %vm2110, %v2102, %v2107
        %v2112 = vrsqrt.pop %v1990
        %v2113 = vmul.f32 %v2112, %v1990
        %v2114 = vmul.f32 %v2113, %v2112
        %v2115 = vmul.f32 0.5, %v2114
        %v2116 = vsub.f32 1.5, %v2115
        %v2117 = vmul.f32 %v2112, %v2116
        %vm2118 = vweird.f32 %v1990
        %vm2119 = vweird.f32 %v2112
        %vm2120 = vmor %vm2118, %vm2119
        %v2121 = vsel %vm2120, %v2112, %v2117
        %v2122 = vrsqrt.pop %v1991
        %v2123 = vmul.f32 %v2122, %v1991
        %v2124 = vmul.f32 %v2123, %v2122
        %v2125 = vmul.f32 0.5, %v2124
        %v2126 = vsub.f32 1.5, %v2125
        %v2127 = vmul.f32 %v2122, %v2126
        %vm2128 = vweird.f32 %v1991
        %vm2129 = vweird.f32 %v2122
        %vm2130 = vmor %vm2128, %vm2129
        %v2131 = vsel %vm2130, %v2122, %v2127
        %v2132 = vrsqrt.pop %v1992
        %v2133 = vmul.f32 %v2132, %v1992
        %v2134 = vmul.f32 %v2133, %v2132
        %v2135 = vmul.f32 0.5, %v2134
        %v2136 = vsub.f32 1.5, %v2135
        %v2137 = vmul.f32 %v2132, %v2136
        %vm2138 = vweird.f32 %v1992
        %vm2139 = vweird.f32 %v2132
        %vm2140 = vmor %vm2138, %vm2139
        %v2141 = vsel %vm2140, %v2132, %v2137
        %v2142 = vrsqrt.pop %v1993
        %v2143 = vmul.f32 %v2142, %v1993
        %v2144 = vmul.f32 %v2143, %v2142
        %v2145 = vmul.f32 0.5, %v2144
        %v2146 = vsub.f32 1.5, %v2145
        %v2147 = vmul.f32 %v2142, %v2146
        %vm2148 = vweird.f32 %v1993
        %vm2149 = vweird.f32 %v2142
        %vm2150 = vmor %vm2148, %vm2149
        %v2151 = vsel %vm2150, %v2142, %v2147
        %v2152 = vrsqrt.pop %v1994
        %v2153 = vmul.f32 %v2152, %v1994
        %v2154 = vmul.f32 %v2153, %v2152
        %v2155 = vmul.f32 0.5, %v2154
        %v2156 = vsub.f32 1.5, %v2155
        %v2157 = vmul.f32 %v2152, %v2156
        %vm2158 = vweird.f32 %v1994
        %vm2159 = vweird.f32 %v2152
        %vm2160 = vmor %vm2158, %vm2159
        %v2161 = vsel %vm2160, %v2152, %v2157
        %v2162 = vrsqrt.pop %v1995
        %v2163 = vmul.f32 %v2162, %v1995
        %v2164 = vmul.f32 %v2163, %v2162
        %v2165 = vmul.f32 0.5, %v2164
        %v2166 = vsub.f32 1.5, %v2165
        %v2167 = vmul.f32 %v2162, %v2166
        %vm2168 = vweird.f32 %v1995
        %vm2169 = vweird.f32 %v2162
        %vm2170 = vmor %vm2168, %vm2169
        %v2171 = vsel %vm2170, %v2162, %v2167
        %v2172 = vrsqrt.pop %v1996
        %v2173 = vmul.f32 %v2172, %v1996
        %v2174 = vmul.f32 %v2173, %v2172
        %v2175 = vmul.f32 0.5, %v2174
        %v2176 = vsub.f32 1.5, %v2175
        %v2177 = vmul.f32 %v2172, %v2176
        %vm2178 = vweird.f32 %v1996
        %vm2179 = vweird.f32 %v2172
        %vm2180 = vmor %vm2178, %vm2179
        %v2181 = vsel %vm2180, %v2172, %v2177
        %v2182 = vrsqrt.pop %v1997
        %v2183 = vmul.f32 %v2182, %v1997
        %v2184 = vmul.f32 %v2183, %v2182
        %v2185 = vmul.f32 0.5, %v2184
        %v2186 = vsub.f32 1.5, %v2185
        %v2187 = vmul.f32 %v2182, %v2186
        %vm2188 = vweird.f32 %v1997
        %vm2189 = vweird.f32 %v2182
        %vm2190 = vmor %vm2188, %vm2189
        %v2191 = vsel %vm2190, %v2182, %v2187
        %v2192 = vrsqrt.pop %v1998
        %v2193 = vmul.f32 %v2192, %v1998
        %v2194 = vmul.f32 %v2193, %v2192
        %v2195 = vmul.f32 0.5, %v2194
        %v2196 = vsub.f32 1.5, %v2195
        %v2197 = vmul.f32 %v2192, %v2196
        %vm2198 = vweird.f32 %v1998
        %vm2199 = vweird.f32 %v2192
        %vm2200 = vmor %vm2198, %vm2199
        %v2201 = vsel %vm2200, %v2192, %v2197
        %v2202 = vrsqrt.pop %v1999
        %v2203 = vmul.f32 %v2202, %v1999
        %v2204 = vmul.f32 %v2203, %v2202
        %v2205 = vmul.f32 0.5, %v2204
        %v2206 = vsub.f32 1.5, %v2205
        %v2207 = vmul.f32 %v2202, %v2206
        %vm2208 = vweird.f32 %v1999
        %vm2209 = vweird.f32 %v2202
        %vm2210 = vmor %vm2208, %vm2209
        %v2211 = vsel %vm2210, %v2202, %v2207
        %v2212 = vrsqrt.pop %v2000
        %v2213 = vmul.f32 %v2212, %v2000
        %v2214 = vmul.f32 %v2213, %v2212
        %v2215 = vmul.f32 0.5, %v2214
        %v2216 = vsub.f32 1.5, %v2215
        %v2217 = vmul.f32 %v2212, %v2216
        %vm2218 = vweird.f32 %v2000
        %vm2219 = vweird.f32 %v2212
        %vm2220 = vmor %vm2218, %vm2219
        %v2221 = vsel %vm2220, %v2212, %v2217
        %v2222 = vrsqrt.pop %v2001
        %v2223 = vmul.f32 %v2222, %v2001
        %v2224 = vmul.f32 %v2223, %v2222
        %v2225 = vmul.f32 0.5, %v2224
        %v2226 = vsub.f32 1.5, %v2225
        %v2227 = vmul.f32 %v2222, %v2226
        %vm2228 = vweird.f32 %v2001
        %vm2229 = vweird.f32 %v2222
        %vm2230 = vmor %vm2228, %vm2229
        %v2231 = vsel %vm2230, %v2222, %v2227
        %v2232 = vrsqrt.pop %v2002
        %v2233 = vmul.f32 %v2232, %v2002
        %v2234 = vmul.f32 %v2233, %v2232
        %v2235 = vmul.f32 0.5, %v2234
        %v2236 = vsub.f32 1.5, %v2235
        %v2237 = vmul.f32 %v2232, %v2236
        %vm2238 = vweird.f32 %v2002
        %vm2239 = vweird.f32 %v2232
        %vm2240 = vmor %vm2238, %vm2239
        %v2241 = vsel %vm2240, %v2232, %v2237
        %v2242 = vrsqrt.pop %v2003
        %v2243 = vmul.f32 %v2242, %v2003
        %v2244 = vmul.f32 %v2243, %v2242
        %v2245 = vmul.f32 0.5, %v2244
        %v2246 = vsub.f32 1.5, %v2245
        %v2247 = vmul.f32 %v2242, %v2246
        %vm2248 = vweird.f32 %v2003
        %vm2249 = vweird.f32 %v2242
        %vm2250 = vmor %vm2248, %vm2249
        %v2251 = vsel %vm2250, %v2242, %v2247
        %v2252 = vrsqrt.pop %v2004
        %v2253 = vmul.f32 %v2252, %v2004
        %v2254 = vmul.f32 %v2253, %v2252
        %v2255 = vmul.f32 0.5, %v2254
        %v2256 = vsub.f32 1.5, %v2255
        %v2257 = vmul.f32 %v2252, %v2256
        %vm2258 = vweird.f32 %v2004
        %vm2259 = vweird.f32 %v2252
        %vm2260 = vmor %vm2258, %vm2259
        %v2261 = vsel %vm2260, %v2252, %v2257
        %v2262 = vrsqrt.pop %v2005
        %v2263 = vmul.f32 %v2262, %v2005
        %v2264 = vmul.f32 %v2263, %v2262
        %v2265 = vmul.f32 0.5, %v2264
        %v2266 = vsub.f32 1.5, %v2265
        %v2267 = vmul.f32 %v2262, %v2266
        %vm2268 = vweird.f32 %v2005
        %vm2269 = vweird.f32 %v2262
        %vm2270 = vmor %vm2268, %vm2269
        %v2271 = vsel %vm2270, %v2262, %v2267
        %v2272 = vrsqrt.pop %v2006
        %v2273 = vmul.f32 %v2272, %v2006
        %v2274 = vmul.f32 %v2273, %v2272
        %v2275 = vmul.f32 0.5, %v2274
        %v2276 = vsub.f32 1.5, %v2275
        %v2277 = vmul.f32 %v2272, %v2276
        %vm2278 = vweird.f32 %v2006
        %vm2279 = vweird.f32 %v2272
        %vm2280 = vmor %vm2278, %vm2279
        %v2281 = vsel %vm2280, %v2272, %v2277
        %v2282 = vrsqrt.pop %v2007
        %v2283 = vmul.f32 %v2282, %v2007
        %v2284 = vmul.f32 %v2283, %v2282
        %v2285 = vmul.f32 0.5, %v2284
        %v2286 = vsub.f32 1.5, %v2285
        %v2287 = vmul.f32 %v2282, %v2286
        %vm2288 = vweird.f32 %v2007
        %vm2289 = vweird.f32 %v2282
        %vm2290 = vmor %vm2288, %vm2289
        %v2291 = vsel %vm2290, %v2282, %v2287
        %v2292 = vrsqrt.pop %v2008
        %v2293 = vmul.f32 %v2292, %v2008
        %v2294 = vmul.f32 %v2293, %v2292
        %v2295 = vmul.f32 0.5, %v2294
        %v2296 = vsub.f32 1.5, %v2295
        %v2297 = vmul.f32 %v2292, %v2296
        %vm2298 = vweird.f32 %v2008
        %vm2299 = vweird.f32 %v2292
        %vm2300 = vmor %vm2298, %vm2299
        %v2301 = vsel %vm2300, %v2292, %v2297
        %v2302 = vrsqrt.pop %v2009
        %v2303 = vmul.f32 %v2302, %v2009
        %v2304 = vmul.f32 %v2303, %v2302
        %v2305 = vmul.f32 0.5, %v2304
        %v2306 = vsub.f32 1.5, %v2305
        %v2307 = vmul.f32 %v2302, %v2306
        %vm2308 = vweird.f32 %v2009
        %vm2309 = vweird.f32 %v2302
        %vm2310 = vmor %vm2308, %vm2309
        %v2311 = vsel %vm2310, %v2302, %v2307
        %v2312 = vrsqrt.pop %v2010
        %v2313 = vmul.f32 %v2312, %v2010
        %v2314 = vmul.f32 %v2313, %v2312
        %v2315 = vmul.f32 0.5, %v2314
        %v2316 = vsub.f32 1.5, %v2315
        %v2317 = vmul.f32 %v2312, %v2316
        %vm2318 = vweird.f32 %v2010
        %vm2319 = vweird.f32 %v2312
        %vm2320 = vmor %vm2318, %vm2319
        %v2321 = vsel %vm2320, %v2312, %v2317
        %v2322 = vrsqrt.pop %v2011
        %v2323 = vmul.f32 %v2322, %v2011
        %v2324 = vmul.f32 %v2323, %v2322
        %v2325 = vmul.f32 0.5, %v2324
        %v2326 = vsub.f32 1.5, %v2325
        %v2327 = vmul.f32 %v2322, %v2326
        %vm2328 = vweird.f32 %v2011
        %vm2329 = vweird.f32 %v2322
        %vm2330 = vmor %vm2328, %vm2329
        %v2331 = vsel %vm2330, %v2322, %v2327
        %v2332 = vmul.f32 %v1820, %v2021
        %v2333 = vmul.f32 %v1821, %v2031
        %v2334 = vmul.f32 %v1822, %v2041
        %v2335 = vmul.f32 %v1823, %v2051
        %v2336 = vmul.f32 %v1824, %v2061
        %v2337 = vmul.f32 %v1825, %v2071
        %v2338 = vmul.f32 %v1826, %v2081
        %v2339 = vmul.f32 %v1827, %v2091
        %v2340 = vmul.f32 %v1828, %v2101
        %v2341 = vmul.f32 %v1829, %v2111
        %v2342 = vmul.f32 %v1830, %v2121
        %v2343 = vmul.f32 %v1831, %v2131
        %v2344 = vmul.f32 %v1832, %v2141
        %v2345 = vmul.f32 %v1833, %v2151
        %v2346 = vmul.f32 %v1834, %v2161
        %v2347 = vmul.f32 %v1835, %v2171
        %v2348 = vmul.f32 %v1836, %v2181
        %v2349 = vmul.f32 %v1837, %v2191
        %v2350 = vmul.f32 %v1838, %v2201
        %v2351 = vmul.f32 %v1839, %v2211
        %v2352 = vmul.f32 %v1840, %v2221
        %v2353 = vmul.f32 %v1841, %v2231
        %v2354 = vmul.f32 %v1842, %v2241
        %v2355 = vmul.f32 %v1843, %v2251
        %v2356 = vmul.f32 %v1844, %v2261
        %v2357 = vmul.f32 %v1845, %v2271
        %v2358 = vmul.f32 %v1846, %v2281
        %v2359 = vmul.f32 %v1847, %v2291
        %v2360 = vmul.f32 %v1848, %v2301
        %v2361 = vmul.f32 %v1849, %v2311
        %v2362 = vmul.f32 %v1850, %v2321
        %v2363 = vmul.f32 %v1851, %v2331
        %v2364 = vld [vmem:[%s6] sm:$0x1]
        %v2366 = vperm.slane %v2364, 0
        %v2368 = vmul.f32 %v2332, %v2366
        %v2369 = vmul.f32 %v2333, %v2366
        %v2370 = vmul.f32 %v2334, %v2366
        %v2371 = vmul.f32 %v2335, %v2366
        %v2372 = vmul.f32 %v2336, %v2366
        %v2373 = vmul.f32 %v2337, %v2366
        %v2374 = vmul.f32 %v2338, %v2366
        %v2375 = vmul.f32 %v2339, %v2366
        %v2376 = vmul.f32 %v2340, %v2366
        %v2377 = vmul.f32 %v2341, %v2366
        %v2378 = vmul.f32 %v2342, %v2366
        %v2379 = vmul.f32 %v2343, %v2366
        %v2380 = vmul.f32 %v2344, %v2366
        %v2381 = vmul.f32 %v2345, %v2366
        %v2382 = vmul.f32 %v2346, %v2366
        %v2383 = vmul.f32 %v2347, %v2366
        %v2384 = vmul.f32 %v2348, %v2366
        %v2385 = vmul.f32 %v2349, %v2366
        %v2386 = vmul.f32 %v2350, %v2366
        %v2387 = vmul.f32 %v2351, %v2366
        %v2388 = vmul.f32 %v2352, %v2366
        %v2389 = vmul.f32 %v2353, %v2366
        %v2390 = vmul.f32 %v2354, %v2366
        %v2391 = vmul.f32 %v2355, %v2366
        %v2392 = vmul.f32 %v2356, %v2366
        %v2393 = vmul.f32 %v2357, %v2366
        %v2394 = vmul.f32 %v2358, %v2366
        %v2395 = vmul.f32 %v2359, %v2366
        %v2396 = vmul.f32 %v2360, %v2366
        %v2397 = vmul.f32 %v2361, %v2366
        %v2398 = vmul.f32 %v2362, %v2366
        %v2399 = vmul.f32 %v2363, %v2366
        %v2400 = vld [vmem:[#allocation10] sm:$0x1]
        %v2402 = vperm.slane %v2400, 0
        %v2404 = vadd.f32 %v2368, %v2402
        %v2405 = vadd.f32 %v2369, %v2402
        %v2406 = vadd.f32 %v2370, %v2402
        %v2407 = vadd.f32 %v2371, %v2402
        %v2408 = vadd.f32 %v2372, %v2402
        %v2409 = vadd.f32 %v2373, %v2402
        %v2410 = vadd.f32 %v2374, %v2402
        %v2411 = vadd.f32 %v2375, %v2402
        %v2412 = vadd.f32 %v2376, %v2402
        %v2413 = vadd.f32 %v2377, %v2402
        %v2414 = vadd.f32 %v2378, %v2402
        %v2415 = vadd.f32 %v2379, %v2402
        %v2416 = vadd.f32 %v2380, %v2402
        %v2417 = vadd.f32 %v2381, %v2402
        %v2418 = vadd.f32 %v2382, %v2402
        %v2419 = vadd.f32 %v2383, %v2402
        %v2420 = vadd.f32 %v2384, %v2402
        %v2421 = vadd.f32 %v2385, %v2402
        %v2422 = vadd.f32 %v2386, %v2402
        %v2423 = vadd.f32 %v2387, %v2402
        %v2424 = vadd.f32 %v2388, %v2402
        %v2425 = vadd.f32 %v2389, %v2402
        %v2426 = vadd.f32 %v2390, %v2402
        %v2427 = vadd.f32 %v2391, %v2402
        %v2428 = vadd.f32 %v2392, %v2402
        %v2429 = vadd.f32 %v2393, %v2402
        %v2430 = vadd.f32 %v2394, %v2402
        %v2431 = vadd.f32 %v2395, %v2402
        %v2432 = vadd.f32 %v2396, %v2402
        %v2433 = vadd.f32 %v2397, %v2402
        %v2434 = vadd.f32 %v2398, %v2402
        %v2435 = vadd.f32 %v2399, %v2402
        %v2436 = vsub.f32 0.0, %v2404
        %v2437 = vsub.f32 0.0, %v2405
        %v2438 = vsub.f32 0.0, %v2406
        %v2439 = vsub.f32 0.0, %v2407
        %v2440 = vsub.f32 0.0, %v2408
        %v2441 = vsub.f32 0.0, %v2409
        %v2442 = vsub.f32 0.0, %v2410
        %v2443 = vsub.f32 0.0, %v2411
        %v2444 = vsub.f32 0.0, %v2412
        %v2445 = vsub.f32 0.0, %v2413
        %v2446 = vsub.f32 0.0, %v2414
        %v2447 = vsub.f32 0.0, %v2415
        %v2448 = vsub.f32 0.0, %v2416
        %v2449 = vsub.f32 0.0, %v2417
        %v2450 = vsub.f32 0.0, %v2418
        %v2451 = vsub.f32 0.0, %v2419
        %v2452 = vsub.f32 0.0, %v2420
        %v2453 = vsub.f32 0.0, %v2421
        %v2454 = vsub.f32 0.0, %v2422
        %v2455 = vsub.f32 0.0, %v2423
        %v2456 = vsub.f32 0.0, %v2424
        %v2457 = vsub.f32 0.0, %v2425
        %v2458 = vsub.f32 0.0, %v2426
        %v2459 = vsub.f32 0.0, %v2427
        %v2460 = vsub.f32 0.0, %v2428
        %v2461 = vsub.f32 0.0, %v2429
        %v2462 = vsub.f32 0.0, %v2430
        %v2463 = vsub.f32 0.0, %v2431
        %v2464 = vsub.f32 0.0, %v2432
        %v2465 = vsub.f32 0.0, %v2433
        %v2466 = vsub.f32 0.0, %v2434
        %v2467 = vsub.f32 0.0, %v2435
        %v2468 = vmul.f32 %v2436, 1.442695
        %v2469 = vpow.pop %v2468
        %v2470 = vmul.f32 %v2437, 1.442695
        %v2471 = vpow.pop %v2470
        %v2472 = vmul.f32 %v2438, 1.442695
        %v2473 = vpow.pop %v2472
        %v2474 = vmul.f32 %v2439, 1.442695
        %v2475 = vpow.pop %v2474
        %v2476 = vmul.f32 %v2440, 1.442695
        %v2477 = vpow.pop %v2476
        %v2478 = vmul.f32 %v2441, 1.442695
        %v2479 = vpow.pop %v2478
        %v2480 = vmul.f32 %v2442, 1.442695
        %v2481 = vpow.pop %v2480
        %v2482 = vmul.f32 %v2443, 1.442695
        %v2483 = vpow.pop %v2482
        %v2484 = vmul.f32 %v2444, 1.442695
        %v2485 = vpow.pop %v2484
        %v2486 = vmul.f32 %v2445, 1.442695
        %v2487 = vpow.pop %v2486
        %v2488 = vmul.f32 %v2446, 1.442695
        %v2489 = vpow.pop %v2488
        %v2490 = vmul.f32 %v2447, 1.442695
        %v2491 = vpow.pop %v2490
        %v2492 = vmul.f32 %v2448, 1.442695
        %v2493 = vpow.pop %v2492
        %v2494 = vmul.f32 %v2449, 1.442695
        %v2495 = vpow.pop %v2494
        %v2496 = vmul.f32 %v2450, 1.442695
        %v2497 = vpow.pop %v2496
        %v2498 = vmul.f32 %v2451, 1.442695
        %v2499 = vpow.pop %v2498
        %v2500 = vmul.f32 %v2452, 1.442695
        %v2501 = vpow.pop %v2500
        %v2502 = vmul.f32 %v2453, 1.442695
        %v2503 = vpow.pop %v2502
        %v2504 = vmul.f32 %v2454, 1.442695
        %v2505 = vpow.pop %v2504
        %v2506 = vmul.f32 %v2455, 1.442695
        %v2507 = vpow.pop %v2506
        %v2508 = vmul.f32 %v2456, 1.442695
        %v2509 = vpow.pop %v2508
        %v2510 = vmul.f32 %v2457, 1.442695
        %v2511 = vpow.pop %v2510
        %v2512 = vmul.f32 %v2458, 1.442695
        %v2513 = vpow.pop %v2512
        %v2514 = vmul.f32 %v2459, 1.442695
        %v2515 = vpow.pop %v2514
        %v2516 = vmul.f32 %v2460, 1.442695
        %v2517 = vpow.pop %v2516
        %v2518 = vmul.f32 %v2461, 1.442695
        %v2519 = vpow.pop %v2518
        %v2520 = vmul.f32 %v2462, 1.442695
        %v2521 = vpow.pop %v2520
        %v2522 = vmul.f32 %v2463, 1.442695
        %v2523 = vpow.pop %v2522
        %v2524 = vmul.f32 %v2464, 1.442695
        %v2525 = vpow.pop %v2524
        %v2526 = vmul.f32 %v2465, 1.442695
        %v2527 = vpow.pop %v2526
        %v2528 = vmul.f32 %v2466, 1.442695
        %v2529 = vpow.pop %v2528
        %v2530 = vmul.f32 %v2467, 1.442695
        %v2531 = vpow.pop %v2530
        %v2532 = vadd.f32 %v2469, 1.0
        %v2533 = vadd.f32 %v2471, 1.0
        %v2534 = vadd.f32 %v2473, 1.0
        %v2535 = vadd.f32 %v2475, 1.0
        %v2536 = vadd.f32 %v2477, 1.0
        %v2537 = vadd.f32 %v2479, 1.0
        %v2538 = vadd.f32 %v2481, 1.0
        %v2539 = vadd.f32 %v2483, 1.0
        %v2540 = vadd.f32 %v2485, 1.0
        %v2541 = vadd.f32 %v2487, 1.0
        %v2542 = vadd.f32 %v2489, 1.0
        %v2543 = vadd.f32 %v2491, 1.0
        %v2544 = vadd.f32 %v2493, 1.0
        %v2545 = vadd.f32 %v2495, 1.0
        %v2546 = vadd.f32 %v2497, 1.0
        %v2547 = vadd.f32 %v2499, 1.0
        %v2548 = vadd.f32 %v2501, 1.0
        %v2549 = vadd.f32 %v2503, 1.0
        %v2550 = vadd.f32 %v2505, 1.0
        %v2551 = vadd.f32 %v2507, 1.0
        %v2552 = vadd.f32 %v2509, 1.0
        %v2553 = vadd.f32 %v2511, 1.0
        %v2554 = vadd.f32 %v2513, 1.0
        %v2555 = vadd.f32 %v2515, 1.0
        %v2556 = vadd.f32 %v2517, 1.0
        %v2557 = vadd.f32 %v2519, 1.0
        %v2558 = vadd.f32 %v2521, 1.0
        %v2559 = vadd.f32 %v2523, 1.0
        %v2560 = vadd.f32 %v2525, 1.0
        %v2561 = vadd.f32 %v2527, 1.0
        %v2562 = vadd.f32 %v2529, 1.0
        %v2563 = vadd.f32 %v2531, 1.0
        %v2564 = vrcp.pop %v2532
        %v2565 = vrcp.pop %v2533
        %v2566 = vrcp.pop %v2534
        %v2567 = vrcp.pop %v2535
        %v2568 = vrcp.pop %v2536
        %v2569 = vrcp.pop %v2537
        %v2570 = vrcp.pop %v2538
        %v2571 = vrcp.pop %v2539
        %v2572 = vrcp.pop %v2540
        %v2573 = vrcp.pop %v2541
        %v2574 = vrcp.pop %v2542
        %v2575 = vrcp.pop %v2543
        %v2576 = vrcp.pop %v2544
        %v2577 = vrcp.pop %v2545
        %v2578 = vrcp.pop %v2546
        %v2579 = vrcp.pop %v2547
        %v2580 = vrcp.pop %v2548
        %v2581 = vrcp.pop %v2549
        %v2582 = vrcp.pop %v2550
        %v2583 = vrcp.pop %v2551
        %v2584 = vrcp.pop %v2552
        %v2585 = vrcp.pop %v2553
        %v2586 = vrcp.pop %v2554
        %v2587 = vrcp.pop %v2555
        %v2588 = vrcp.pop %v2556
        %v2589 = vrcp.pop %v2557
        %v2590 = vrcp.pop %v2558
        %v2591 = vrcp.pop %v2559
        %v2592 = vrcp.pop %v2560
        %v2593 = vrcp.pop %v2561
        %v2594 = vrcp.pop %v2562
        %v2595 = vrcp.pop %v2563
        %v2596 = vmul.f32 %v2404, %v2564
        %v2597 = vmul.f32 %v2405, %v2565
        %v2598 = vmul.f32 %v2406, %v2566
        %v2599 = vmul.f32 %v2407, %v2567
        %v2600 = vmul.f32 %v2408, %v2568
        %v2601 = vmul.f32 %v2409, %v2569
        %v2602 = vmul.f32 %v2410, %v2570
        %v2603 = vmul.f32 %v2411, %v2571
        %v2604 = vmul.f32 %v2412, %v2572
        %v2605 = vmul.f32 %v2413, %v2573
        %v2606 = vmul.f32 %v2414, %v2574
        %v2607 = vmul.f32 %v2415, %v2575
        %v2608 = vmul.f32 %v2416, %v2576
        %v2609 = vmul.f32 %v2417, %v2577
        %v2610 = vmul.f32 %v2418, %v2578
        %v2611 = vmul.f32 %v2419, %v2579
        %v2612 = vmul.f32 %v2420, %v2580
        %v2613 = vmul.f32 %v2421, %v2581
        %v2614 = vmul.f32 %v2422, %v2582
        %v2615 = vmul.f32 %v2423, %v2583
        %v2616 = vmul.f32 %v2424, %v2584
        %v2617 = vmul.f32 %v2425, %v2585
        %v2618 = vmul.f32 %v2426, %v2586
        %v2619 = vmul.f32 %v2427, %v2587
        %v2620 = vmul.f32 %v2428, %v2588
        %v2621 = vmul.f32 %v2429, %v2589
        %v2622 = vmul.f32 %v2430, %v2590
        %v2623 = vmul.f32 %v2431, %v2591
        %v2624 = vmul.f32 %v2432, %v2592
        %v2625 = vmul.f32 %v2433, %v2593
        %v2626 = vmul.f32 %v2434, %v2594
        %v2627 = vmul.f32 %v2435, %v2595
        %v2628 = vld [vmem:[#allocation11] sm:$0xff]
        %v2629 = vld [vmem:[#allocation11 + $0x8] sm:$0xff]
        %v2630 = vld [vmem:[#allocation11 + $0x10] sm:$0xff]
        %v2631 = vld [vmem:[#allocation11 + $0x18] sm:$0xff]
        %v2632 = vld [vmem:[#allocation11 + $0x20] sm:$0xff]
        %v2633 = vld [vmem:[#allocation11 + $0x28] sm:$0xff]
        %v2634 = vld [vmem:[#allocation11 + $0x30] sm:$0xff]
        %v2635 = vld [vmem:[#allocation11 + $0x38] sm:$0xff]
        %v2636 = vld [vmem:[#allocation11 + $0x40] sm:$0xff]
        %v2637 = vld [vmem:[#allocation11 + $0x48] sm:$0xff]
        %v2638 = vld [vmem:[#allocation11 + $0x50] sm:$0xff]
        %v2639 = vld [vmem:[#allocation11 + $0x58] sm:$0xff]
        %v2640 = vld [vmem:[#allocation11 + $0x60] sm:$0xff]
        %v2641 = vld [vmem:[#allocation11 + $0x68] sm:$0xff]
        %v2642 = vld [vmem:[#allocation11 + $0x70] sm:$0xff]
        %v2643 = vld [vmem:[#allocation11 + $0x78] sm:$0xff]
        %v2644 = vld [vmem:[%s9] sm:$0x1]
        %v2646 = vperm.slane %v2644, 0
        %2648 = vmatpush.msra.mxu0 %v2643
        %2649 = vmatpush.msra.mxu0 %v2642
        %2650 = vmatpush.msra.mxu0 %v2641
        %2651 = vmatpush.msra.mxu0 %v2640
        %2652 = vmatpush.msra.mxu0 %v2639
        %2653 = vmatpush.msra.mxu0 %v2638
        %2654 = vmatpush.msra.mxu0 %v2637
        %2655 = vmatpush.msra.mxu0 %v2636
        %2656 = vmatpush.msra.mxu0 %v2635
        %2657 = vmatpush.msra.mxu0 %v2634
        %2658 = vmatpush.msra.mxu0 %v2633
        %2659 = vmatpush.msra.mxu0 %v2632
        %2660 = vmatpush.msra.mxu0 %v2631
        %2661 = vmatpush.msra.mxu0 %v2630
        %2662 = vmatpush.msra.mxu0 %v2629
        %2663 = vmatpush.msra.mxu0 %v2628
        %2664 = vmatmul.f32.gmra.mxu0 %v2596
        %v2665 = vpop.f32.mrf.mxu0
        %v2666 = vadd.f32 %v2646, %v2665
        %2667 = vmatmul.f32.gmra.mxu0 %v2597
        %v2668 = vpop.f32.mrf.mxu0
        %v2669 = vadd.f32 %v2646, %v2668
        %2670 = vmatmul.f32.gmra.mxu0 %v2598
        %v2671 = vpop.f32.mrf.mxu0
        %v2672 = vadd.f32 %v2646, %v2671
        %2673 = vmatmul.f32.gmra.mxu0 %v2599
        %v2674 = vpop.f32.mrf.mxu0
        %v2675 = vadd.f32 %v2646, %v2674
        %2676 = vmatmul.f32.gmra.mxu0 %v2600
        %v2677 = vpop.f32.mrf.mxu0
        %v2678 = vadd.f32 %v2646, %v2677
        %2679 = vmatmul.f32.gmra.mxu0 %v2601
        %v2680 = vpop.f32.mrf.mxu0
        %v2681 = vadd.f32 %v2646, %v2680
        %2682 = vmatmul.f32.gmra.mxu0 %v2602
        %v2683 = vpop.f32.mrf.mxu0
        %v2684 = vadd.f32 %v2646, %v2683
        %2685 = vmatmul.f32.gmra.mxu0 %v2603
        %v2686 = vpop.f32.mrf.mxu0
        %v2687 = vadd.f32 %v2646, %v2686
        %2688 = vmatmul.f32.gmra.mxu0 %v2604
        %v2689 = vpop.f32.mrf.mxu0
        %v2690 = vadd.f32 %v2646, %v2689
        %2691 = vmatmul.f32.gmra.mxu0 %v2605
        %v2692 = vpop.f32.mrf.mxu0
        %v2693 = vadd.f32 %v2646, %v2692
        %2694 = vmatmul.f32.gmra.mxu0 %v2606
        %v2695 = vpop.f32.mrf.mxu0
        %v2696 = vadd.f32 %v2646, %v2695
        %2697 = vmatmul.f32.gmra.mxu0 %v2607
        %v2698 = vpop.f32.mrf.mxu0
        %v2699 = vadd.f32 %v2646, %v2698
        %2700 = vmatmul.f32.gmra.mxu0 %v2608
        %v2701 = vpop.f32.mrf.mxu0
        %v2702 = vadd.f32 %v2646, %v2701
        %2703 = vmatmul.f32.gmra.mxu0 %v2609
        %v2704 = vpop.f32.mrf.mxu0
        %v2705 = vadd.f32 %v2646, %v2704
        %2706 = vmatmul.f32.gmra.mxu0 %v2610
        %v2707 = vpop.f32.mrf.mxu0
        %v2708 = vadd.f32 %v2646, %v2707
        %2709 = vmatmul.f32.gmra.mxu0 %v2611
        %v2710 = vpop.f32.mrf.mxu0
        %v2711 = vadd.f32 %v2646, %v2710
        %2712 = vmatmul.f32.gmra.mxu0 %v2612
        %v2713 = vpop.f32.mrf.mxu0
        %v2714 = vadd.f32 %v2646, %v2713
        %2715 = vmatmul.f32.gmra.mxu0 %v2613
        %v2716 = vpop.f32.mrf.mxu0
        %v2717 = vadd.f32 %v2646, %v2716
        %2718 = vmatmul.f32.gmra.mxu0 %v2614
        %v2719 = vpop.f32.mrf.mxu0
        %v2720 = vadd.f32 %v2646, %v2719
        %2721 = vmatmul.f32.gmra.mxu0 %v2615
        %v2722 = vpop.f32.mrf.mxu0
        %v2723 = vadd.f32 %v2646, %v2722
        %2724 = vmatmul.f32.gmra.mxu0 %v2616
        %v2725 = vpop.f32.mrf.mxu0
        %v2726 = vadd.f32 %v2646, %v2725
        %2727 = vmatmul.f32.gmra.mxu0 %v2617
        %v2728 = vpop.f32.mrf.mxu0
        %v2729 = vadd.f32 %v2646, %v2728
        %2730 = vmatmul.f32.gmra.mxu0 %v2618
        %v2731 = vpop.f32.mrf.mxu0
        %v2732 = vadd.f32 %v2646, %v2731
        %2733 = vmatmul.f32.gmra.mxu0 %v2619
        %v2734 = vpop.f32.mrf.mxu0
        %v2735 = vadd.f32 %v2646, %v2734
        %2736 = vmatmul.f32.gmra.mxu0 %v2620
        %v2737 = vpop.f32.mrf.mxu0
        %v2738 = vadd.f32 %v2646, %v2737
        %2739 = vmatmul.f32.gmra.mxu0 %v2621
        %v2740 = vpop.f32.mrf.mxu0
        %v2741 = vadd.f32 %v2646, %v2740
        %2742 = vmatmul.f32.gmra.mxu0 %v2622
        %v2743 = vpop.f32.mrf.mxu0
        %v2744 = vadd.f32 %v2646, %v2743
        %2745 = vmatmul.f32.gmra.mxu0 %v2623
        %v2746 = vpop.f32.mrf.mxu0
        %v2747 = vadd.f32 %v2646, %v2746
        %2748 = vmatmul.f32.gmra.mxu0 %v2624
        %v2749 = vpop.f32.mrf.mxu0
        %v2750 = vadd.f32 %v2646, %v2749
        %2751 = vmatmul.f32.gmra.mxu0 %v2625
        %v2752 = vpop.f32.mrf.mxu0
        %v2753 = vadd.f32 %v2646, %v2752
        %2754 = vmatmul.f32.gmra.mxu0 %v2626
        %v2755 = vpop.f32.mrf.mxu0
        %v2756 = vadd.f32 %v2646, %v2755
        %2757 = vmatmul.f32.gmra.mxu0 %v2627
        %v2758 = vpop.f32.mrf.mxu0
        %v2759 = vadd.f32 %v2646, %v2758
        %2760 = vdwg.mxu0
        %2761 = vst [vmem:[%s483] sm:$0xff] %v2666
        %2762 = vst [vmem:[%s483 + $0x8] sm:$0xff] %v2669
        %2763 = vst [vmem:[%s483 + $0x10] sm:$0xff] %v2672
        %2764 = vst [vmem:[%s483 + $0x18] sm:$0xff] %v2675
        %2765 = vst [vmem:[%s483 + $0x20] sm:$0xff] %v2678
        %2766 = vst [vmem:[%s483 + $0x28] sm:$0xff] %v2681
        %2767 = vst [vmem:[%s483 + $0x30] sm:$0xff] %v2684
        %2768 = vst [vmem:[%s483 + $0x38] sm:$0xff] %v2687
        %2769 = vst [vmem:[%s483 + $0x40] sm:$0xff] %v2690
        %2770 = vst [vmem:[%s483 + $0x48] sm:$0xff] %v2693
        %2771 = vst [vmem:[%s483 + $0x50] sm:$0xff] %v2696
        %2772 = vst [vmem:[%s483 + $0x58] sm:$0xff] %v2699
        %2773 = vst [vmem:[%s483 + $0x60] sm:$0xff] %v2702
        %2774 = vst [vmem:[%s483 + $0x68] sm:$0xff] %v2705
        %2775 = vst [vmem:[%s483 + $0x70] sm:$0xff] %v2708
        %2776 = vst [vmem:[%s483 + $0x78] sm:$0xff] %v2711
        %2777 = vst [vmem:[%s483 + $0x80] sm:$0xff] %v2714
        %2778 = vst [vmem:[%s483 + $0x88] sm:$0xff] %v2717
        %2779 = vst [vmem:[%s483 + $0x90] sm:$0xff] %v2720
        %2780 = vst [vmem:[%s483 + $0x98] sm:$0xff] %v2723
        %2781 = vst [vmem:[%s483 + $0xa0] sm:$0xff] %v2726
        %2782 = vst [vmem:[%s483 + $0xa8] sm:$0xff] %v2729
        %2783 = vst [vmem:[%s483 + $0xb0] sm:$0xff] %v2732
        %2784 = vst [vmem:[%s483 + $0xb8] sm:$0xff] %v2735
        %2785 = vst [vmem:[%s483 + $0xc0] sm:$0xff] %v2738
        %2786 = vst [vmem:[%s483 + $0xc8] sm:$0xff] %v2741
        %2787 = vst [vmem:[%s483 + $0xd0] sm:$0xff] %v2744
        %2788 = vst [vmem:[%s483 + $0xd8] sm:$0xff] %v2747
        %2789 = vst [vmem:[%s483 + $0xe0] sm:$0xff] %v2750
        %2790 = vst [vmem:[%s483 + $0xe8] sm:$0xff] %v2753
        %2791 = vst [vmem:[%s483 + $0xf0] sm:$0xff] %v2756
        %2792 = vst [vmem:[%s483 + $0xf8] sm:$0xff] %v2759
        %s2793 = sand.u32 %s260, 1
        %s2794 = scalar_lea.sflag [#allocation4], %s2793
        %s2795 = sand.u32 %s260, 1
        %s2796 = smul.addr %s2795, 256
        %s2797 = scalar_lea.vmem [#allocation13], %s2796
        // Predicated region
        $region85: #{fc_time_embed.1} parent=59 // pred_check
          %p2798 = pneg %p270
        $region86: #{fc_time_embed.1} parent=59 // pred_check_branch
          %2800 = sbr.rel (%p2798) target = $region88
        $region87: #{fc_time_embed.1} parent=59 // pred_region
          %s2801 = smul.u32 32, %s32
          %2803 = vsyncadd %s2794, 0
          %s2804 = smul.addr %s2801, 8
          %s2805 = scalar_lea.hbm %s10, %s2804
          %s2806 = sshll.u32 %s2797, 4
          %s2807 = int_to_ptr.vmem [resolvable:$true] %s2806
          %s2808 = sshll.u32 %s2805, 4
          %s2809 = int_to_ptr.hbm [resolvable:$true] %s2808
          %2814 = dma.vmem_to_hbm [thread:$0]  %s2807, 4096, %s2809, %s2794, 128, 128, 8
        $region88: #{fc_time_embed.1} parent=59 // pred_fallthru
          _
      $region60: #{fc_time_embed.1} parent=5 // pred_fallthru
        _
      %p2815 = scmp.le.s32.totalorder 2, %s27
      // Predicated region
      $region89: #{fc_time_embed.1} parent=5 // pred_check
        %p2816 = pneg %p2815
      $region90: #{fc_time_embed.1} parent=5 // pred_check_branch
        %2818 = sbr.rel (%p2816) target = $region92
      $region91: #{fc_time_embed.1} parent=5 // pred_region
        %s2819 = ssub.s32 %s27, 2
        // Predicated region
        $region93: #{fc_time_embed.1} parent=91 // pred_check
          %p2820 = pneg %p276
        $region94: #{fc_time_embed.1} parent=91 // pred_check_branch
          %2822 = sbr.rel (%p2820) target = $region96
        $region95: #{fc_time_embed.1} parent=91 // pred_region
          %s2823 = sand.u32 %s261, 1
          %s2824 = scalar_lea.sflag [#allocation4], %s2823
          %s2825 = sand.u32 %s261, 1
          %s2826 = smul.addr %s2825, 256
          %s2827 = scalar_lea.vmem [#allocation13], %s2826
          %2829 = dma.done %s2824, 4096
        $region96: #{fc_time_embed.1} parent=91 // pred_fallthru
          _
      $region92: #{fc_time_embed.1} parent=5 // pred_fallthru
        _
    $region6: #{fc_time_embed.1} parent=1 // loop_footer
      %s31 = sadd.s32 1, %s27
    $region7: #{fc_time_embed.1} parent=1 // loop_footer_branch
      %26 = sbr.rel target = $region3
    $region8: #{fc_time_embed.1} parent=1 // loop_exit
      _
    %2830 = vsyncpa [#allocation3], 1
    %s2831 = scalar_lea.sflag [#allocation3], 1
    %2832 = vsyncpa %s2831, 1
    %2833 = vsyncpa [#allocation6], 1
    %s2834 = scalar_lea.sflag [#allocation6], 1
    %2835 = vsyncpa %s2834, 1
    %2836 = vsyncpa [#allocation9], 1
    %2837 = vsyncpa [#allocation12], 1
    %2838 = vsyncpa [#allocation4], 1
    %s2839 = scalar_lea.sflag [#allocation4], 1
    %2840 = vsyncpa %s2839, 1

</llo_original>
